<compile_context>
chip_gen: v7x
topology: tpu7x:2x2x1
jax: 0.10.0
libtpu: 0.0.40
codegen_flags: <defaults>
</compile_context>

<pallas_src>
import functools
import math

import jax
import jax.numpy as jnp
import numpy as np
from jax.experimental import pallas as pl
from jax.experimental.pallas import tpu as pltpu


# ------------------------------ helpers ------------------------------------ #
def _shift_rows(v, k, n):
    """result[:, i] = v[:, i + k] over the flattened spatial (lane) axis,
    zero-filled out of bounds.  v: (R, n) float32, k: static int, |k| < n."""
    if k == 0:
        return v
    r = v.shape[0]
    z = jnp.zeros((r, abs(k)), v.dtype)
    if k > 0:
        return jnp.concatenate([v[:, k:], z], axis=1)
    return jnp.concatenate([z, v[:, : n + k]], axis=1)


# ----------------------------- Pallas kernel -------------------------------- #
def _cbam_kernel(x_ref, w1_ref, b1_ref, w2_ref, b2_ref, wc_ref, bc_ref, o_ref,
                 *, H, W, HW, HWp):
    x = x_ref[0, :, :].astype(jnp.float32)                # (C, HWp)

    # ------------------------- Channel attention --------------------------- #
    if HWp != HW:
        valid = jax.lax.broadcasted_iota(jnp.int32, (1, HWp), 1) < HW
        pmax = jnp.max(jnp.where(valid, x, -jnp.inf), axis=1, keepdims=True)
        psum = jnp.sum(jnp.where(valid, x, 0.0), axis=1, keepdims=True)
    else:
        pmax = jnp.max(x, axis=1, keepdims=True)          # (C, 1)
        psum = jnp.sum(x, axis=1, keepdims=True)          # (C, 1)
    pavg = psum * (1.0 / HW)                              # (C, 1)

    # Fused shared MLP: both pooled vectors go through one matmul pair.
    p = jnp.concatenate([pmax, pavg], axis=1)             # (C, 2)
    h = jnp.dot(w1_ref[...], p, preferred_element_type=jnp.float32) + b1_ref[...]
    h = jnp.maximum(h, 0.0)                               # ReLU, (Cr, 2)
    y = jnp.dot(w2_ref[...], h, preferred_element_type=jnp.float32) + b2_ref[...]
    ca = jax.nn.sigmoid(y[:, 0:1] + y[:, 1:2])            # (C, 1)

    x_ca = x * ca                                         # (C, HWp) channel-gated
    o_ref[0, :, :] = x_ca.astype(o_ref.dtype)             # park x_ca in the output tile

    # ------------------------- Spatial attention --------------------------- #
    smax = jnp.max(x_ca, axis=0, keepdims=True)           # (1, HWp) max over C
    savg = jnp.mean(x_ca, axis=0, keepdims=True)          # (1, HWp) mean over C
    stacked = jnp.concatenate([smax, savg], axis=0)       # (2, HWp)

    # Pre-mask the SOURCE maps once per dx (equivalent to masking every tap's
    # output at the row boundary): for dx>0 source column < dx never feeds a
    # valid output; for dx<0 source column >= W+dx never does.
    col = jax.lax.broadcasted_iota(jnp.int32, (1, HWp), 1) % W
    src = {}
    for dx in range(-3, 4):
        if dx > 0:
            src[dx] = jnp.where(col >= dx, stacked, 0.0)
        elif dx < 0:
            src[dx] = jnp.where(col < (W + dx), stacked, 0.0)
        else:
            src[dx] = stacked

    # 7x7 conv (2 in-channels -> 1 out), stride 1, pad 3, as 49 shift+FMA taps
    # on the stacked (2, HWp) maps, summed over the 2 sublanes at the end.
    wmat = wc_ref[...]                                    # (2, 49): [max-row, avg-row]
    acc = jnp.zeros((2, HWp), jnp.float32)
    for ky in range(7):
        dy = ky - 3
        for kx in range(7):
            dx = kx - 3
            s = dy * W + dx
            if abs(s) >= HWp:
                continue                                  # tap never in range
            idx = ky * 7 + kx
            acc = acc + wmat[:, idx:idx + 1] * _shift_rows(src[dx], s, HWp)

    conv = acc[0:1, :] + acc[1:2, :]                      # (1, HWp)
    sa = jax.nn.sigmoid(conv + bc_ref[0])                 # (1, HWp) spatial gate

    # Final gate: read-modify-write the output tile (x_ca already lives there).
    o_ref[0, :, :] = (o_ref[0, :, :].astype(jnp.float32) * sa).astype(o_ref.dtype)


# ------------------------------ Public wrapper ------------------------------ #
def cbam_forward(x, params):
    """x: (B, C, H, W) NCHW, float32 or bfloat16 (like the PyTorch module)."""
    B, C, H, W = x.shape
    HW = H * W
    Cr = params["w1"].shape[0]

    # Pad the flattened spatial axis to a lane multiple for dense loads/stores.
    HW_pad = max(128, ((HW + 127) // 128) * 128)
    x_flat = x.reshape(B, C, HW)                          # free row-major reshape
    if HW_pad != HW:
        x_flat = jnp.pad(x_flat, ((0, 0), (0, 0), (0, HW_pad - HW)))

    w1 = params["w1"].astype(jnp.float32)                 # (Cr, C)
    b1 = params["b1"].reshape(Cr, 1).astype(jnp.float32)
    w2 = params["w2"].astype(jnp.float32)                 # (C, Cr)
    b2 = params["b2"].reshape(C, 1).astype(jnp.float32)
    wc = params["wconv"][0].reshape(2, 49).astype(jnp.float32)   # (2, 49)
    bc = params["bconv"].reshape(1).astype(jnp.float32)          # (1,) scalar in SMEM

    # Rough single-pass VMEM budget: in+out double-buffered stripes + temps.
    stripe_bytes = C * HW_pad * 4
    vmem_limit = int(min(max(6 * stripe_bytes + (2 << 20), 32 * 1024 * 1024),
                         100 * 1024 * 1024))

    const = lambda b: (0, 0)
    kernel = functools.partial(_cbam_kernel, H=H, W=W, HW=HW, HWp=HW_pad)
    out = pl.pallas_call(
        kernel,
        out_shape=jax.ShapeDtypeStruct((B, C, HW_pad), x.dtype),
        grid=(B,),
        in_specs=[
            pl.BlockSpec((1, C, HW_pad), lambda b: (b, 0, 0)),   # x stripe (lane-dense)
            pl.BlockSpec((Cr, C), const),                        # w1
            pl.BlockSpec((Cr, 1), const),                        # b1
            pl.BlockSpec((C, Cr), const),                        # w2
            pl.BlockSpec((C, 1), const),                         # b2
            pl.BlockSpec((2, 49), const),                        # conv weights (VMEM)
            pl.BlockSpec(memory_space=pltpu.MemorySpace.SMEM),   # conv bias (scalar)
        ],
        out_specs=pl.BlockSpec((1, C, HW_pad), lambda b: (b, 0, 0)),
        compiler_params=pltpu.CompilerParams(
            dimension_semantics=("parallel",),
            vmem_limit_bytes=vmem_limit),
    )(x_flat, w1, b1, w2, b2, wc, bc)

    if HW_pad != HW:
        out = out[:, :, :HW]
    return out.reshape(B, C, H, W)


# ----------------------------- Pure-JAX reference --------------------------- #
def ref_forward(x, p):
    maxp = jnp.max(x, axis=(2, 3))                        # (B, C)
    avgp = jnp.mean(x, axis=(2, 3))                       # (B, C)

    def mlp(v):                                           # v: (B, C)
        h = jax.nn.relu(v @ p["w1"].T + p["b1"])
        return h @ p["w2"].T + p["b2"]

    ca = jax.nn.sigmoid(mlp(maxp) + mlp(avgp))            # (B, C)
    x_ca = x * ca[:, :, None, None]

    smax = jnp.max(x_ca, axis=1, keepdims=True)           # (B, 1, H, W)
    savg = jnp.mean(x_ca, axis=1, keepdims=True)          # (B, 1, H, W)
    inp = jnp.concatenate([smax, savg], axis=1)           # (B, 2, H, W)
    conv = jax.lax.conv_general_dilated(
        inp, p["wconv"], window_strides=(1, 1), padding=((3, 3), (3, 3)),
        dimension_numbers=("NCHW", "OIHW", "NCHW"))
    conv = conv + p["bconv"][None, :, None, None]
    sa = jax.nn.sigmoid(conv)                             # (B, 1, H, W)
    return x_ca * sa


# ---------------------------------- Params ----------------------------------- #
def init_params(key, channels, r):
    cr = channels // r
    ks = jax.random.split(key, 6)

    def u(k, shape, fan_in):
        s = 1.0 / math.sqrt(fan_in)
        return jax.random.uniform(k, shape, jnp.float32, -s, s)

    return {
        "w1": u(ks[0], (cr, channels), channels),   # Linear(C, C//r) weight (out,in)
        "b1": u(ks[1], (cr,), channels),
        "w2": u(ks[2], (channels, cr), cr),         # Linear(C//r, C) weight (out,in)
        "b2": u(ks[3], (channels,), cr),
        "wconv": u(ks[4], (1, 2, 7, 7), 2 * 49),    # Conv2d(2, 1, 7, padding=3)
        "bconv": u(ks[5], (1,), 2 * 49),
    }


if __name__ == "__main__":
    B, C, H, W = 2, 32, 16, 16
    r = 8
    key = jax.random.PRNGKey(0)
    kx, kp = jax.random.split(key)
    x = jax.random.normal(kx, (B, C, H, W), jnp.float32)
    params = init_params(kp, C, r)

    out = jax.block_until_ready(cbam_forward(x, params))
    ref = jax.block_until_ready(ref_forward(x, params))
    assert out.shape == x.shape
    np.testing.assert_allclose(np.asarray(out), np.asarray(ref),
                               rtol=2e-3, atol=2e-3)
    print("KERNEL_OK")
</pallas_src>

<mosaic_0001>
module attributes {stable_mosaic.version = 11 : i64} {
  func.func @_cbam_kernel(%arg0: i32, %arg1: memref<1x32x256xf32, #tpu.memory_space<vmem>>, %arg2: memref<4x32xf32, #tpu.memory_space<vmem>>, %arg3: memref<4x1xf32, #tpu.memory_space<vmem>>, %arg4: memref<32x4xf32, #tpu.memory_space<vmem>>, %arg5: memref<32x1xf32, #tpu.memory_space<vmem>>, %arg6: memref<2x49xf32, #tpu.memory_space<vmem>>, %arg7: memref<1xf32, #tpu.memory_space<smem>>, %arg8: memref<1x32x256xf32, #tpu.memory_space<vmem>>) attributes {dimension_semantics = [#tpu.dimension_semantics<parallel>], iteration_bounds = array<i64: 2>, scalar_prefetch = 0 : i64, scratch_operands = 0 : i64, tpu.core_type = #tpu.core_type<tc>, window_params = [{transform_indices = @transform_0, window_bounds = array<i64: 1, 32, 256>}, {pipeline_mode = #tpu.pipeline_mode<synchronous>, transform_indices = @transform_1, window_bounds = array<i64: 4, 32>}, {pipeline_mode = #tpu.pipeline_mode<synchronous>, transform_indices = @transform_2, window_bounds = array<i64: 4, 1>}, {pipeline_mode = #tpu.pipeline_mode<synchronous>, transform_indices = @transform_3, window_bounds = array<i64: 32, 4>}, {pipeline_mode = #tpu.pipeline_mode<synchronous>, transform_indices = @transform_4, window_bounds = array<i64: 32, 1>}, {pipeline_mode = #tpu.pipeline_mode<synchronous>, transform_indices = @transform_5, window_bounds = array<i64: 2, 49>}, {transform_indices = @transform_6, window_bounds = array<i64: 1>}, {transform_indices = @transform_7, window_bounds = array<i64: 1, 32, 256>}]} {
    %c0 = arith.constant 0 : index
    %c0_0 = arith.constant 0 : index
    %c0_1 = arith.constant 0 : index
    %0 = vector.load %arg1[%c0, %c0_0, %c0_1] : memref<1x32x256xf32, #tpu.memory_space<vmem>>, vector<1x32x256xf32>
    %1 = vector.shape_cast %0 : vector<1x32x256xf32> to vector<32x256xf32>
    %cst = arith.constant dense<0xFF800000> : vector<32xf32>
    %2 = vector.multi_reduction <maximumf>, %1, %cst [1] : vector<32x256xf32> to vector<32xf32>
    %3 = vector.shape_cast %2 : vector<32xf32> to vector<32x1xf32>
    %cst_2 = arith.constant dense<0.000000e+00> : vector<32xf32>
    %4 = vector.multi_reduction <add>, %1, %cst_2 [1] : vector<32x256xf32> to vector<32xf32>
    %5 = vector.shape_cast %4 : vector<32xf32> to vector<32x1xf32>
    %cst_3 = arith.constant 3.906250e-03 : f32
    %6 = vector.broadcast %cst_3 : f32 to vector<32x1xf32>
    %7 = arith.mulf %5, %6 : vector<32x1xf32>
    %8 = tpu.concatenate %3, %7 in 1 : vector<32x1xf32>, vector<32x1xf32> -> vector<32x2xf32>
    %c0_4 = arith.constant 0 : index
    %c0_5 = arith.constant 0 : index
    %9 = vector.load %arg2[%c0_4, %c0_5] : memref<4x32xf32, #tpu.memory_space<vmem>>, vector<4x32xf32>
    %cst_6 = arith.constant dense<0.000000e+00> : vector<4x2xf32>
    %10 = tpu.matmul %9, %8, %cst_6 {dimension_numbers = #tpu.dot_dimension_numbers<[1], [0], [0], [1], [0, 0, 1, 1], [], []>} : vector<4x32xf32>, vector<32x2xf32>, vector<4x2xf32> -> vector<4x2xf32>
    %c0_7 = arith.constant 0 : index
    %c0_8 = arith.constant 0 : index
    %11 = vector.load %arg3[%c0_7, %c0_8] : memref<4x1xf32, #tpu.memory_space<vmem>>, vector<4x1xf32>
    %12 = vector.broadcast %11 : vector<4x1xf32> to vector<4x2xf32>
    %13 = arith.addf %10, %12 : vector<4x2xf32>
    %cst_9 = arith.constant 0.000000e+00 : f32
    %14 = vector.broadcast %cst_9 : f32 to vector<4x2xf32>
    %15 = arith.maximumf %13, %14 : vector<4x2xf32>
    %c0_10 = arith.constant 0 : index
    %c0_11 = arith.constant 0 : index
    %16 = vector.load %arg4[%c0_10, %c0_11] : memref<32x4xf32, #tpu.memory_space<vmem>>, vector<32x4xf32>
    %cst_12 = arith.constant dense<0.000000e+00> : vector<32x2xf32>
    %17 = tpu.matmul %16, %15, %cst_12 {dimension_numbers = #tpu.dot_dimension_numbers<[1], [0], [0], [1], [0, 0, 1, 1], [], []>} : vector<32x4xf32>, vector<4x2xf32>, vector<32x2xf32> -> vector<32x2xf32>
    %c0_13 = arith.constant 0 : index
    %c0_14 = arith.constant 0 : index
    %18 = vector.load %arg5[%c0_13, %c0_14] : memref<32x1xf32, #tpu.memory_space<vmem>>, vector<32x1xf32>
    %19 = vector.broadcast %18 : vector<32x1xf32> to vector<32x2xf32>
    %20 = arith.addf %17, %19 : vector<32x2xf32>
    %21 = vector.extract_strided_slice %20 {offsets = [0, 0], sizes = [32, 1], strides = [1, 1]} : vector<32x2xf32> to vector<32x1xf32>
    %22 = vector.extract_strided_slice %20 {offsets = [0, 1], sizes = [32, 1], strides = [1, 1]} : vector<32x2xf32> to vector<32x1xf32>
    %23 = arith.addf %21, %22 : vector<32x1xf32>
    %24 = arith.negf %23 : vector<32x1xf32>
    %25 = math.exp %24 : vector<32x1xf32>
    %cst_15 = arith.constant 1.000000e+00 : f32
    %26 = vector.broadcast %cst_15 : f32 to vector<32x1xf32>
    %27 = arith.addf %26, %25 : vector<32x1xf32>
    %28 = arith.divf %26, %27 : vector<32x1xf32>
    %29 = vector.broadcast %28 : vector<32x1xf32> to vector<32x256xf32>
    %30 = arith.mulf %1, %29 : vector<32x256xf32>
    %c0_16 = arith.constant 0 : index
    %c0_17 = arith.constant 0 : index
    %c0_18 = arith.constant 0 : index
    %31 = vector.load %arg8[%c0_16, %c0_17, %c0_18] : memref<1x32x256xf32, #tpu.memory_space<vmem>>, vector<1x32x256xf32>
    %32 = vector.shape_cast %31 : vector<1x32x256xf32> to vector<32x256xf32>
    %33 = vector.shape_cast %30 : vector<32x256xf32> to vector<1x32x256xf32>
    tpu.vector_store %arg8[%c0_16, %c0_17, %c0_18], %33 {strides = array<i32>} : memref<1x32x256xf32, #tpu.memory_space<vmem>>, vector<1x32x256xf32>,
    %cst_19 = arith.constant dense<0xFF800000> : vector<256xf32>
    %34 = vector.multi_reduction <maximumf>, %30, %cst_19 [0] : vector<32x256xf32> to vector<256xf32>
    %35 = vector.shape_cast %34 : vector<256xf32> to vector<1x256xf32>
    %cst_20 = arith.constant dense<0.000000e+00> : vector<256xf32>
    %36 = vector.multi_reduction <add>, %30, %cst_20 [0] : vector<32x256xf32> to vector<256xf32>
    %37 = vector.shape_cast %36 : vector<256xf32> to vector<1x256xf32>
    %cst_21 = arith.constant 3.200000e+01 : f32
    %38 = vector.broadcast %cst_21 : f32 to vector<1x256xf32>
    %39 = arith.divf %37, %38 : vector<1x256xf32>
    %40 = tpu.concatenate %35, %39 in 0 : vector<1x256xf32>, vector<1x256xf32> -> vector<2x256xf32>
    %41 = tpu.iota {dimensions = array<i32: 1>} : vector<1x256xi32>
    %c16_i32 = arith.constant 16 : i32
    %c0_i32 = arith.constant 0 : i32
    %42 = arith.cmpi eq, %c16_i32, %c0_i32 : i32
    %c1_i32 = arith.constant 1 : i32
    %43 = arith.select %42, %c1_i32, %c16_i32 : i32
    %44 = vector.broadcast %43 : i32 to vector<1x256xi32>
    %45 = arith.remsi %41, %44 : vector<1x256xi32>
    %c0_i32_22 = arith.constant 0 : i32
    %46 = vector.broadcast %c0_i32_22 : i32 to vector<1x256xi32>
    %47 = arith.cmpi ne, %45, %46 : vector<1x256xi32>
    %c0_i32_23 = arith.constant 0 : i32
    %48 = vector.broadcast %c0_i32_23 : i32 to vector<1x256xi32>
    %49 = arith.cmpi slt, %45, %48 : vector<1x256xi32>
    %c0_i32_24 = arith.constant 0 : i32
    %50 = arith.cmpi slt, %43, %c0_i32_24 : i32
    %51 = vector.broadcast %50 : i1 to vector<1x256xi1>
    %52 = vector.broadcast %51 : vector<1x256xi1> to vector<1x256xi1>
    %53 = arith.xori %49, %52 : vector<1x256xi1>
    %54 = arith.andi %53, %47 : vector<1x256xi1>
    %55 = vector.broadcast %43 : i32 to vector<1x256xi32>
    %56 = arith.addi %45, %55 : vector<1x256xi32>
    %57 = arith.select %54, %56, %45 : vector<1x256xi1>, vector<1x256xi32>
    %c13_i32 = arith.constant 13 : i32
    %58 = vector.broadcast %c13_i32 : i32 to vector<1x256xi32>
    %59 = arith.cmpi slt, %57, %58 : vector<1x256xi32>
    %cst_25 = arith.constant 0.000000e+00 : f32
    %60 = vector.shape_cast %59 : vector<1x256xi1> to vector<1x256xi1>
    %61 = vector.broadcast %60 : vector<1x256xi1> to vector<2x256xi1>
    %62 = vector.broadcast %cst_25 : f32 to vector<2x256xf32>
    %63 = arith.select %61, %40, %62 : vector<2x256xi1>, vector<2x256xf32>
    %c14_i32 = arith.constant 14 : i32
    %64 = vector.broadcast %c14_i32 : i32 to vector<1x256xi32>
    %65 = arith.cmpi slt, %57, %64 : vector<1x256xi32>
    %cst_26 = arith.constant 0.000000e+00 : f32
    %66 = vector.shape_cast %65 : vector<1x256xi1> to vector<1x256xi1>
    %67 = vector.broadcast %66 : vector<1x256xi1> to vector<2x256xi1>
    %68 = vector.broadcast %cst_26 : f32 to vector<2x256xf32>
    %69 = arith.select %67, %40, %68 : vector<2x256xi1>, vector<2x256xf32>
    %c15_i32 = arith.constant 15 : i32
    %70 = vector.broadcast %c15_i32 : i32 to vector<1x256xi32>
    %71 = arith.cmpi slt, %57, %70 : vector<1x256xi32>
    %cst_27 = arith.constant 0.000000e+00 : f32
    %72 = vector.shape_cast %71 : vector<1x256xi1> to vector<1x256xi1>
    %73 = vector.broadcast %72 : vector<1x256xi1> to vector<2x256xi1>
    %74 = vector.broadcast %cst_27 : f32 to vector<2x256xf32>
    %75 = arith.select %73, %40, %74 : vector<2x256xi1>, vector<2x256xf32>
    %c1_i32_28 = arith.constant 1 : i32
    %76 = vector.broadcast %c1_i32_28 : i32 to vector<1x256xi32>
    %77 = arith.cmpi sge, %57, %76 : vector<1x256xi32>
    %cst_29 = arith.constant 0.000000e+00 : f32
    %78 = vector.shape_cast %77 : vector<1x256xi1> to vector<1x256xi1>
    %79 = vector.broadcast %78 : vector<1x256xi1> to vector<2x256xi1>
    %80 = vector.broadcast %cst_29 : f32 to vector<2x256xf32>
    %81 = arith.select %79, %40, %80 : vector<2x256xi1>, vector<2x256xf32>
    %c2_i32 = arith.constant 2 : i32
    %82 = vector.broadcast %c2_i32 : i32 to vector<1x256xi32>
    %83 = arith.cmpi sge, %57, %82 : vector<1x256xi32>
    %cst_30 = arith.constant 0.000000e+00 : f32
    %84 = vector.shape_cast %83 : vector<1x256xi1> to vector<1x256xi1>
    %85 = vector.broadcast %84 : vector<1x256xi1> to vector<2x256xi1>
    %86 = vector.broadcast %cst_30 : f32 to vector<2x256xf32>
    %87 = arith.select %85, %40, %86 : vector<2x256xi1>, vector<2x256xf32>
    %c3_i32 = arith.constant 3 : i32
    %88 = vector.broadcast %c3_i32 : i32 to vector<1x256xi32>
    %89 = arith.cmpi sge, %57, %88 : vector<1x256xi32>
    %cst_31 = arith.constant 0.000000e+00 : f32
    %90 = vector.shape_cast %89 : vector<1x256xi1> to vector<1x256xi1>
    %91 = vector.broadcast %90 : vector<1x256xi1> to vector<2x256xi1>
    %92 = vector.broadcast %cst_31 : f32 to vector<2x256xf32>
    %93 = arith.select %91, %40, %92 : vector<2x256xi1>, vector<2x256xf32>
    %c0_32 = arith.constant 0 : index
    %c0_33 = arith.constant 0 : index
    %94 = vector.load %arg6[%c0_32, %c0_33] : memref<2x49xf32, #tpu.memory_space<vmem>>, vector<2x49xf32>
    %cst_34 = arith.constant 0.000000e+00 : f32
    %95 = vector.broadcast %cst_34 : f32 to vector<2x256xf32>
    %96 = vector.extract_strided_slice %94 {offsets = [0, 0], sizes = [2, 1], strides = [1, 1]} : vector<2x49xf32> to vector<2x1xf32>
    %cst_35 = arith.constant 0.000000e+00 : f32
    %97 = vector.broadcast %cst_35 : f32 to vector<2x51xf32>
    %98 = vector.extract_strided_slice %63 {offsets = [0, 0], sizes = [2, 205], strides = [1, 1]} : vector<2x256xf32> to vector<2x205xf32>
    %99 = tpu.concatenate %97, %98 in 1 : vector<2x51xf32>, vector<2x205xf32> -> vector<2x256xf32>
    %100 = vector.broadcast %96 : vector<2x1xf32> to vector<2x256xf32>
    %101 = arith.mulf %100, %99 : vector<2x256xf32>
    %102 = arith.addf %95, %101 : vector<2x256xf32>
    %103 = vector.extract_strided_slice %94 {offsets = [0, 1], sizes = [2, 1], strides = [1, 1]} : vector<2x49xf32> to vector<2x1xf32>
    %cst_36 = arith.constant 0.000000e+00 : f32
    %104 = vector.broadcast %cst_36 : f32 to vector<2x50xf32>
    %105 = vector.extract_strided_slice %69 {offsets = [0, 0], sizes = [2, 206], strides = [1, 1]} : vector<2x256xf32> to vector<2x206xf32>
    %106 = tpu.concatenate %104, %105 in 1 : vector<2x50xf32>, vector<2x206xf32> -> vector<2x256xf32>
    %107 = vector.broadcast %103 : vector<2x1xf32> to vector<2x256xf32>
    %108 = arith.mulf %107, %106 : vector<2x256xf32>
    %109 = arith.addf %102, %108 : vector<2x256xf32>
    %110 = vector.extract_strided_slice %94 {offsets = [0, 2], sizes = [2, 1], strides = [1, 1]} : vector<2x49xf32> to vector<2x1xf32>
    %cst_37 = arith.constant 0.000000e+00 : f32
    %111 = vector.broadcast %cst_37 : f32 to vector<2x49xf32>
    %112 = vector.extract_strided_slice %75 {offsets = [0, 0], sizes = [2, 207], strides = [1, 1]} : vector<2x256xf32> to vector<2x207xf32>
    %113 = tpu.concatenate %111, %112 in 1 : vector<2x49xf32>, vector<2x207xf32> -> vector<2x256xf32>
    %114 = vector.broadcast %110 : vector<2x1xf32> to vector<2x256xf32>
    %115 = arith.mulf %114, %113 : vector<2x256xf32>
    %116 = arith.addf %109, %115 : vector<2x256xf32>
    %117 = vector.extract_strided_slice %94 {offsets = [0, 3], sizes = [2, 1], strides = [1, 1]} : vector<2x49xf32> to vector<2x1xf32>
    %cst_38 = arith.constant 0.000000e+00 : f32
    %118 = vector.broadcast %cst_38 : f32 to vector<2x48xf32>
    %119 = vector.extract_strided_slice %40 {offsets = [0, 0], sizes = [2, 208], strides = [1, 1]} : vector<2x256xf32> to vector<2x208xf32>
    %120 = tpu.concatenate %118, %119 in 1 : vector<2x48xf32>, vector<2x208xf32> -> vector<2x256xf32>
    %121 = vector.broadcast %117 : vector<2x1xf32> to vector<2x256xf32>
    %122 = arith.mulf %121, %120 : vector<2x256xf32>
    %123 = arith.addf %116, %122 : vector<2x256xf32>
    %124 = vector.extract_strided_slice %94 {offsets = [0, 4], sizes = [2, 1], strides = [1, 1]} : vector<2x49xf32> to vector<2x1xf32>
    %cst_39 = arith.constant 0.000000e+00 : f32
    %125 = vector.broadcast %cst_39 : f32 to vector<2x47xf32>
    %126 = vector.extract_strided_slice %81 {offsets = [0, 0], sizes = [2, 209], strides = [1, 1]} : vector<2x256xf32> to vector<2x209xf32>
    %127 = tpu.concatenate %125, %126 in 1 : vector<2x47xf32>, vector<2x209xf32> -> vector<2x256xf32>
    %128 = vector.broadcast %124 : vector<2x1xf32> to vector<2x256xf32>
    %129 = arith.mulf %128, %127 : vector<2x256xf32>
    %130 = arith.addf %123, %129 : vector<2x256xf32>
    %131 = vector.extract_strided_slice %94 {offsets = [0, 5], sizes = [2, 1], strides = [1, 1]} : vector<2x49xf32> to vector<2x1xf32>
    %cst_40 = arith.constant 0.000000e+00 : f32
    %132 = vector.broadcast %cst_40 : f32 to vector<2x46xf32>
    %133 = vector.extract_strided_slice %87 {offsets = [0, 0], sizes = [2, 210], strides = [1, 1]} : vector<2x256xf32> to vector<2x210xf32>
    %134 = tpu.concatenate %132, %133 in 1 : vector<2x46xf32>, vector<2x210xf32> -> vector<2x256xf32>
    %135 = vector.broadcast %131 : vector<2x1xf32> to vector<2x256xf32>
    %136 = arith.mulf %135, %134 : vector<2x256xf32>
    %137 = arith.addf %130, %136 : vector<2x256xf32>
    %138 = vector.extract_strided_slice %94 {offsets = [0, 6], sizes = [2, 1], strides = [1, 1]} : vector<2x49xf32> to vector<2x1xf32>
    %cst_41 = arith.constant 0.000000e+00 : f32
    %139 = vector.broadcast %cst_41 : f32 to vector<2x45xf32>
    %140 = vector.extract_strided_slice %93 {offsets = [0, 0], sizes = [2, 211], strides = [1, 1]} : vector<2x256xf32> to vector<2x211xf32>
    %141 = tpu.concatenate %139, %140 in 1 : vector<2x45xf32>, vector<2x211xf32> -> vector<2x256xf32>
    %142 = vector.broadcast %138 : vector<2x1xf32> to vector<2x256xf32>
    %143 = arith.mulf %142, %141 : vector<2x256xf32>
    %144 = arith.addf %137, %143 : vector<2x256xf32>
    %145 = vector.extract_strided_slice %94 {offsets = [0, 7], sizes = [2, 1], strides = [1, 1]} : vector<2x49xf32> to vector<2x1xf32>
    %cst_42 = arith.constant 0.000000e+00 : f32
    %146 = vector.broadcast %cst_42 : f32 to vector<2x35xf32>
    %147 = vector.extract_strided_slice %63 {offsets = [0, 0], sizes = [2, 221], strides = [1, 1]} : vector<2x256xf32> to vector<2x221xf32>
    %148 = tpu.concatenate %146, %147 in 1 : vector<2x35xf32>, vector<2x221xf32> -> vector<2x256xf32>
    %149 = vector.broadcast %145 : vector<2x1xf32> to vector<2x256xf32>
    %150 = arith.mulf %149, %148 : vector<2x256xf32>
    %151 = arith.addf %144, %150 : vector<2x256xf32>
    %152 = vector.extract_strided_slice %94 {offsets = [0, 8], sizes = [2, 1], strides = [1, 1]} : vector<2x49xf32> to vector<2x1xf32>
    %cst_43 = arith.constant 0.000000e+00 : f32
    %153 = vector.broadcast %cst_43 : f32 to vector<2x34xf32>
    %154 = vector.extract_strided_slice %69 {offsets = [0, 0], sizes = [2, 222], strides = [1, 1]} : vector<2x256xf32> to vector<2x222xf32>
    %155 = tpu.concatenate %153, %154 in 1 : vector<2x34xf32>, vector<2x222xf32> -> vector<2x256xf32>
    %156 = vector.broadcast %152 : vector<2x1xf32> to vector<2x256xf32>
    %157 = arith.mulf %156, %155 : vector<2x256xf32>
    %158 = arith.addf %151, %157 : vector<2x256xf32>
    %159 = vector.extract_strided_slice %94 {offsets = [0, 9], sizes = [2, 1], strides = [1, 1]} : vector<2x49xf32> to vector<2x1xf32>
    %cst_44 = arith.constant 0.000000e+00 : f32
    %160 = vector.broadcast %cst_44 : f32 to vector<2x33xf32>
    %161 = vector.extract_strided_slice %75 {offsets = [0, 0], sizes = [2, 223], strides = [1, 1]} : vector<2x256xf32> to vector<2x223xf32>
    %162 = tpu.concatenate %160, %161 in 1 : vector<2x33xf32>, vector<2x223xf32> -> vector<2x256xf32>
    %163 = vector.broadcast %159 : vector<2x1xf32> to vector<2x256xf32>
    %164 = arith.mulf %163, %162 : vector<2x256xf32>
    %165 = arith.addf %158, %164 : vector<2x256xf32>
    %166 = vector.extract_strided_slice %94 {offsets = [0, 10], sizes = [2, 1], strides = [1, 1]} : vector<2x49xf32> to vector<2x1xf32>
    %cst_45 = arith.constant 0.000000e+00 : f32
    %167 = vector.broadcast %cst_45 : f32 to vector<2x32xf32>
    %168 = vector.extract_strided_slice %40 {offsets = [0, 0], sizes = [2, 224], strides = [1, 1]} : vector<2x256xf32> to vector<2x224xf32>
    %169 = tpu.concatenate %167, %168 in 1 : vector<2x32xf32>, vector<2x224xf32> -> vector<2x256xf32>
    %170 = vector.broadcast %166 : vector<2x1xf32> to vector<2x256xf32>
    %171 = arith.mulf %170, %169 : vector<2x256xf32>
    %172 = arith.addf %165, %171 : vector<2x256xf32>
    %173 = vector.extract_strided_slice %94 {offsets = [0, 11], sizes = [2, 1], strides = [1, 1]} : vector<2x49xf32> to vector<2x1xf32>
    %cst_46 = arith.constant 0.000000e+00 : f32
    %174 = vector.broadcast %cst_46 : f32 to vector<2x31xf32>
    %175 = vector.extract_strided_slice %81 {offsets = [0, 0], sizes = [2, 225], strides = [1, 1]} : vector<2x256xf32> to vector<2x225xf32>
    %176 = tpu.concatenate %174, %175 in 1 : vector<2x31xf32>, vector<2x225xf32> -> vector<2x256xf32>
    %177 = vector.broadcast %173 : vector<2x1xf32> to vector<2x256xf32>
    %178 = arith.mulf %177, %176 : vector<2x256xf32>
    %179 = arith.addf %172, %178 : vector<2x256xf32>
    %180 = vector.extract_strided_slice %94 {offsets = [0, 12], sizes = [2, 1], strides = [1, 1]} : vector<2x49xf32> to vector<2x1xf32>
    %cst_47 = arith.constant 0.000000e+00 : f32
    %181 = vector.broadcast %cst_47 : f32 to vector<2x30xf32>
    %182 = vector.extract_strided_slice %87 {offsets = [0, 0], sizes = [2, 226], strides = [1, 1]} : vector<2x256xf32> to vector<2x226xf32>
    %183 = tpu.concatenate %181, %182 in 1 : vector<2x30xf32>, vector<2x226xf32> -> vector<2x256xf32>
    %184 = vector.broadcast %180 : vector<2x1xf32> to vector<2x256xf32>
    %185 = arith.mulf %184, %183 : vector<2x256xf32>
    %186 = arith.addf %179, %185 : vector<2x256xf32>
    %187 = vector.extract_strided_slice %94 {offsets = [0, 13], sizes = [2, 1], strides = [1, 1]} : vector<2x49xf32> to vector<2x1xf32>
    %cst_48 = arith.constant 0.000000e+00 : f32
    %188 = vector.broadcast %cst_48 : f32 to vector<2x29xf32>
    %189 = vector.extract_strided_slice %93 {offsets = [0, 0], sizes = [2, 227], strides = [1, 1]} : vector<2x256xf32> to vector<2x227xf32>
    %190 = tpu.concatenate %188, %189 in 1 : vector<2x29xf32>, vector<2x227xf32> -> vector<2x256xf32>
    %191 = vector.broadcast %187 : vector<2x1xf32> to vector<2x256xf32>
    %192 = arith.mulf %191, %190 : vector<2x256xf32>
    %193 = arith.addf %186, %192 : vector<2x256xf32>
    %194 = vector.extract_strided_slice %94 {offsets = [0, 14], sizes = [2, 1], strides = [1, 1]} : vector<2x49xf32> to vector<2x1xf32>
    %cst_49 = arith.constant 0.000000e+00 : f32
    %195 = vector.broadcast %cst_49 : f32 to vector<2x19xf32>
    %196 = vector.extract_strided_slice %63 {offsets = [0, 0], sizes = [2, 237], strides = [1, 1]} : vector<2x256xf32> to vector<2x237xf32>
    %197 = tpu.concatenate %195, %196 in 1 : vector<2x19xf32>, vector<2x237xf32> -> vector<2x256xf32>
    %198 = vector.broadcast %194 : vector<2x1xf32> to vector<2x256xf32>
    %199 = arith.mulf %198, %197 : vector<2x256xf32>
    %200 = arith.addf %193, %199 : vector<2x256xf32>
    %201 = vector.extract_strided_slice %94 {offsets = [0, 15], sizes = [2, 1], strides = [1, 1]} : vector<2x49xf32> to vector<2x1xf32>
    %cst_50 = arith.constant 0.000000e+00 : f32
    %202 = vector.broadcast %cst_50 : f32 to vector<2x18xf32>
    %203 = vector.extract_strided_slice %69 {offsets = [0, 0], sizes = [2, 238], strides = [1, 1]} : vector<2x256xf32> to vector<2x238xf32>
    %204 = tpu.concatenate %202, %203 in 1 : vector<2x18xf32>, vector<2x238xf32> -> vector<2x256xf32>
    %205 = vector.broadcast %201 : vector<2x1xf32> to vector<2x256xf32>
    %206 = arith.mulf %205, %204 : vector<2x256xf32>
    %207 = arith.addf %200, %206 : vector<2x256xf32>
    %208 = vector.extract_strided_slice %94 {offsets = [0, 16], sizes = [2, 1], strides = [1, 1]} : vector<2x49xf32> to vector<2x1xf32>
    %cst_51 = arith.constant 0.000000e+00 : f32
    %209 = vector.broadcast %cst_51 : f32 to vector<2x17xf32>
    %210 = vector.extract_strided_slice %75 {offsets = [0, 0], sizes = [2, 239], strides = [1, 1]} : vector<2x256xf32> to vector<2x239xf32>
    %211 = tpu.concatenate %209, %210 in 1 : vector<2x17xf32>, vector<2x239xf32> -> vector<2x256xf32>
    %212 = vector.broadcast %208 : vector<2x1xf32> to vector<2x256xf32>
    %213 = arith.mulf %212, %211 : vector<2x256xf32>
    %214 = arith.addf %207, %213 : vector<2x256xf32>
    %215 = vector.extract_strided_slice %94 {offsets = [0, 17], sizes = [2, 1], strides = [1, 1]} : vector<2x49xf32> to vector<2x1xf32>
    %cst_52 = arith.constant 0.000000e+00 : f32
    %216 = vector.broadcast %cst_52 : f32 to vector<2x16xf32>
    %217 = vector.extract_strided_slice %40 {offsets = [0, 0], sizes = [2, 240], strides = [1, 1]} : vector<2x256xf32> to vector<2x240xf32>
    %218 = tpu.concatenate %216, %217 in 1 : vector<2x16xf32>, vector<2x240xf32> -> vector<2x256xf32>
    %219 = vector.broadcast %215 : vector<2x1xf32> to vector<2x256xf32>
    %220 = arith.mulf %219, %218 : vector<2x256xf32>
    %221 = arith.addf %214, %220 : vector<2x256xf32>
    %222 = vector.extract_strided_slice %94 {offsets = [0, 18], sizes = [2, 1], strides = [1, 1]} : vector<2x49xf32> to vector<2x1xf32>
    %cst_53 = arith.constant 0.000000e+00 : f32
    %223 = vector.broadcast %cst_53 : f32 to vector<2x15xf32>
    %224 = vector.extract_strided_slice %81 {offsets = [0, 0], sizes = [2, 241], strides = [1, 1]} : vector<2x256xf32> to vector<2x241xf32>
    %225 = tpu.concatenate %223, %224 in 1 : vector<2x15xf32>, vector<2x241xf32> -> vector<2x256xf32>
    %226 = vector.broadcast %222 : vector<2x1xf32> to vector<2x256xf32>
    %227 = arith.mulf %226, %225 : vector<2x256xf32>
    %228 = arith.addf %221, %227 : vector<2x256xf32>
    %229 = vector.extract_strided_slice %94 {offsets = [0, 19], sizes = [2, 1], strides = [1, 1]} : vector<2x49xf32> to vector<2x1xf32>
    %cst_54 = arith.constant 0.000000e+00 : f32
    %230 = vector.broadcast %cst_54 : f32 to vector<2x14xf32>
    %231 = vector.extract_strided_slice %87 {offsets = [0, 0], sizes = [2, 242], strides = [1, 1]} : vector<2x256xf32> to vector<2x242xf32>
    %232 = tpu.concatenate %230, %231 in 1 : vector<2x14xf32>, vector<2x242xf32> -> vector<2x256xf32>
    %233 = vector.broadcast %229 : vector<2x1xf32> to vector<2x256xf32>
    %234 = arith.mulf %233, %232 : vector<2x256xf32>
    %235 = arith.addf %228, %234 : vector<2x256xf32>
    %236 = vector.extract_strided_slice %94 {offsets = [0, 20], sizes = [2, 1], strides = [1, 1]} : vector<2x49xf32> to vector<2x1xf32>
    %cst_55 = arith.constant 0.000000e+00 : f32
    %237 = vector.broadcast %cst_55 : f32 to vector<2x13xf32>
    %238 = vector.extract_strided_slice %93 {offsets = [0, 0], sizes = [2, 243], strides = [1, 1]} : vector<2x256xf32> to vector<2x243xf32>
    %239 = tpu.concatenate %237, %238 in 1 : vector<2x13xf32>, vector<2x243xf32> -> vector<2x256xf32>
    %240 = vector.broadcast %236 : vector<2x1xf32> to vector<2x256xf32>
    %241 = arith.mulf %240, %239 : vector<2x256xf32>
    %242 = arith.addf %235, %241 : vector<2x256xf32>
    %243 = vector.extract_strided_slice %94 {offsets = [0, 21], sizes = [2, 1], strides = [1, 1]} : vector<2x49xf32> to vector<2x1xf32>
    %cst_56 = arith.constant 0.000000e+00 : f32
    %244 = vector.broadcast %cst_56 : f32 to vector<2x3xf32>
    %245 = vector.extract_strided_slice %63 {offsets = [0, 0], sizes = [2, 253], strides = [1, 1]} : vector<2x256xf32> to vector<2x253xf32>
    %246 = tpu.concatenate %244, %245 in 1 : vector<2x3xf32>, vector<2x253xf32> -> vector<2x256xf32>
    %247 = vector.broadcast %243 : vector<2x1xf32> to vector<2x256xf32>
    %248 = arith.mulf %247, %246 : vector<2x256xf32>
    %249 = arith.addf %242, %248 : vector<2x256xf32>
    %250 = vector.extract_strided_slice %94 {offsets = [0, 22], sizes = [2, 1], strides = [1, 1]} : vector<2x49xf32> to vector<2x1xf32>
    %cst_57 = arith.constant 0.000000e+00 : f32
    %251 = vector.broadcast %cst_57 : f32 to vector<2x2xf32>
    %252 = vector.extract_strided_slice %69 {offsets = [0, 0], sizes = [2, 254], strides = [1, 1]} : vector<2x256xf32> to vector<2x254xf32>
    %253 = tpu.concatenate %251, %252 in 1 : vector<2x2xf32>, vector<2x254xf32> -> vector<2x256xf32>
    %254 = vector.broadcast %250 : vector<2x1xf32> to vector<2x256xf32>
    %255 = arith.mulf %254, %253 : vector<2x256xf32>
    %256 = arith.addf %249, %255 : vector<2x256xf32>
    %257 = vector.extract_strided_slice %94 {offsets = [0, 23], sizes = [2, 1], strides = [1, 1]} : vector<2x49xf32> to vector<2x1xf32>
    %cst_58 = arith.constant 0.000000e+00 : f32
    %258 = vector.broadcast %cst_58 : f32 to vector<2x1xf32>
    %259 = vector.extract_strided_slice %75 {offsets = [0, 0], sizes = [2, 255], strides = [1, 1]} : vector<2x256xf32> to vector<2x255xf32>
    %260 = tpu.concatenate %258, %259 in 1 : vector<2x1xf32>, vector<2x255xf32> -> vector<2x256xf32>
    %261 = vector.broadcast %257 : vector<2x1xf32> to vector<2x256xf32>
    %262 = arith.mulf %261, %260 : vector<2x256xf32>
    %263 = arith.addf %256, %262 : vector<2x256xf32>
    %264 = vector.extract_strided_slice %94 {offsets = [0, 24], sizes = [2, 1], strides = [1, 1]} : vector<2x49xf32> to vector<2x1xf32>
    %265 = vector.broadcast %264 : vector<2x1xf32> to vector<2x256xf32>
    %266 = arith.mulf %265, %40 : vector<2x256xf32>
    %267 = arith.addf %263, %266 : vector<2x256xf32>
    %268 = vector.extract_strided_slice %94 {offsets = [0, 25], sizes = [2, 1], strides = [1, 1]} : vector<2x49xf32> to vector<2x1xf32>
    %cst_59 = arith.constant 0.000000e+00 : f32
    %269 = vector.broadcast %cst_59 : f32 to vector<2x1xf32>
    %270 = vector.extract_strided_slice %81 {offsets = [0, 1], sizes = [2, 255], strides = [1, 1]} : vector<2x256xf32> to vector<2x255xf32>
    %271 = tpu.concatenate %270, %269 in 1 : vector<2x255xf32>, vector<2x1xf32> -> vector<2x256xf32>
    %272 = vector.broadcast %268 : vector<2x1xf32> to vector<2x256xf32>
    %273 = arith.mulf %272, %271 : vector<2x256xf32>
    %274 = arith.addf %267, %273 : vector<2x256xf32>
    %275 = vector.extract_strided_slice %94 {offsets = [0, 26], sizes = [2, 1], strides = [1, 1]} : vector<2x49xf32> to vector<2x1xf32>
    %cst_60 = arith.constant 0.000000e+00 : f32
    %276 = vector.broadcast %cst_60 : f32 to vector<2x2xf32>
    %277 = vector.extract_strided_slice %87 {offsets = [0, 2], sizes = [2, 254], strides = [1, 1]} : vector<2x256xf32> to vector<2x254xf32>
    %278 = tpu.concatenate %277, %276 in 1 : vector<2x254xf32>, vector<2x2xf32> -> vector<2x256xf32>
    %279 = vector.broadcast %275 : vector<2x1xf32> to vector<2x256xf32>
    %280 = arith.mulf %279, %278 : vector<2x256xf32>
    %281 = arith.addf %274, %280 : vector<2x256xf32>
    %282 = vector.extract_strided_slice %94 {offsets = [0, 27], sizes = [2, 1], strides = [1, 1]} : vector<2x49xf32> to vector<2x1xf32>
    %cst_61 = arith.constant 0.000000e+00 : f32
    %283 = vector.broadcast %cst_61 : f32 to vector<2x3xf32>
    %284 = vector.extract_strided_slice %93 {offsets = [0, 3], sizes = [2, 253], strides = [1, 1]} : vector<2x256xf32> to vector<2x253xf32>
    %285 = tpu.concatenate %284, %283 in 1 : vector<2x253xf32>, vector<2x3xf32> -> vector<2x256xf32>
    %286 = vector.broadcast %282 : vector<2x1xf32> to vector<2x256xf32>
    %287 = arith.mulf %286, %285 : vector<2x256xf32>
    %288 = arith.addf %281, %287 : vector<2x256xf32>
    %289 = vector.extract_strided_slice %94 {offsets = [0, 28], sizes = [2, 1], strides = [1, 1]} : vector<2x49xf32> to vector<2x1xf32>
    %cst_62 = arith.constant 0.000000e+00 : f32
    %290 = vector.broadcast %cst_62 : f32 to vector<2x13xf32>
    %291 = vector.extract_strided_slice %63 {offsets = [0, 13], sizes = [2, 243], strides = [1, 1]} : vector<2x256xf32> to vector<2x243xf32>
    %292 = tpu.concatenate %291, %290 in 1 : vector<2x243xf32>, vector<2x13xf32> -> vector<2x256xf32>
    %293 = vector.broadcast %289 : vector<2x1xf32> to vector<2x256xf32>
    %294 = arith.mulf %293, %292 : vector<2x256xf32>
    %295 = arith.addf %288, %294 : vector<2x256xf32>
    %296 = vector.extract_strided_slice %94 {offsets = [0, 29], sizes = [2, 1], strides = [1, 1]} : vector<2x49xf32> to vector<2x1xf32>
    %cst_63 = arith.constant 0.000000e+00 : f32
    %297 = vector.broadcast %cst_63 : f32 to vector<2x14xf32>
    %298 = vector.extract_strided_slice %69 {offsets = [0, 14], sizes = [2, 242], strides = [1, 1]} : vector<2x256xf32> to vector<2x242xf32>
    %299 = tpu.concatenate %298, %297 in 1 : vector<2x242xf32>, vector<2x14xf32> -> vector<2x256xf32>
    %300 = vector.broadcast %296 : vector<2x1xf32> to vector<2x256xf32>
    %301 = arith.mulf %300, %299 : vector<2x256xf32>
    %302 = arith.addf %295, %301 : vector<2x256xf32>
    %303 = vector.extract_strided_slice %94 {offsets = [0, 30], sizes = [2, 1], strides = [1, 1]} : vector<2x49xf32> to vector<2x1xf32>
    %cst_64 = arith.constant 0.000000e+00 : f32
    %304 = vector.broadcast %cst_64 : f32 to vector<2x15xf32>
    %305 = vector.extract_strided_slice %75 {offsets = [0, 15], sizes = [2, 241], strides = [1, 1]} : vector<2x256xf32> to vector<2x241xf32>
    %306 = tpu.concatenate %305, %304 in 1 : vector<2x241xf32>, vector<2x15xf32> -> vector<2x256xf32>
    %307 = vector.broadcast %303 : vector<2x1xf32> to vector<2x256xf32>
    %308 = arith.mulf %307, %306 : vector<2x256xf32>
    %309 = arith.addf %302, %308 : vector<2x256xf32>
    %310 = vector.extract_strided_slice %94 {offsets = [0, 31], sizes = [2, 1], strides = [1, 1]} : vector<2x49xf32> to vector<2x1xf32>
    %cst_65 = arith.constant 0.000000e+00 : f32
    %311 = vector.broadcast %cst_65 : f32 to vector<2x16xf32>
    %312 = vector.extract_strided_slice %40 {offsets = [0, 16], sizes = [2, 240], strides = [1, 1]} : vector<2x256xf32> to vector<2x240xf32>
    %313 = tpu.concatenate %312, %311 in 1 : vector<2x240xf32>, vector<2x16xf32> -> vector<2x256xf32>
    %314 = vector.broadcast %310 : vector<2x1xf32> to vector<2x256xf32>
    %315 = arith.mulf %314, %313 : vector<2x256xf32>
    %316 = arith.addf %309, %315 : vector<2x256xf32>
    %317 = vector.extract_strided_slice %94 {offsets = [0, 32], sizes = [2, 1], strides = [1, 1]} : vector<2x49xf32> to vector<2x1xf32>
    %cst_66 = arith.constant 0.000000e+00 : f32
    %318 = vector.broadcast %cst_66 : f32 to vector<2x17xf32>
    %319 = vector.extract_strided_slice %81 {offsets = [0, 17], sizes = [2, 239], strides = [1, 1]} : vector<2x256xf32> to vector<2x239xf32>
    %320 = tpu.concatenate %319, %318 in 1 : vector<2x239xf32>, vector<2x17xf32> -> vector<2x256xf32>
    %321 = vector.broadcast %317 : vector<2x1xf32> to vector<2x256xf32>
    %322 = arith.mulf %321, %320 : vector<2x256xf32>
    %323 = arith.addf %316, %322 : vector<2x256xf32>
    %324 = vector.extract_strided_slice %94 {offsets = [0, 33], sizes = [2, 1], strides = [1, 1]} : vector<2x49xf32> to vector<2x1xf32>
    %cst_67 = arith.constant 0.000000e+00 : f32
    %325 = vector.broadcast %cst_67 : f32 to vector<2x18xf32>
    %326 = vector.extract_strided_slice %87 {offsets = [0, 18], sizes = [2, 238], strides = [1, 1]} : vector<2x256xf32> to vector<2x238xf32>
    %327 = tpu.concatenate %326, %325 in 1 : vector<2x238xf32>, vector<2x18xf32> -> vector<2x256xf32>
    %328 = vector.broadcast %324 : vector<2x1xf32> to vector<2x256xf32>
    %329 = arith.mulf %328, %327 : vector<2x256xf32>
    %330 = arith.addf %323, %329 : vector<2x256xf32>
    %331 = vector.extract_strided_slice %94 {offsets = [0, 34], sizes = [2, 1], strides = [1, 1]} : vector<2x49xf32> to vector<2x1xf32>
    %cst_68 = arith.constant 0.000000e+00 : f32
    %332 = vector.broadcast %cst_68 : f32 to vector<2x19xf32>
    %333 = vector.extract_strided_slice %93 {offsets = [0, 19], sizes = [2, 237], strides = [1, 1]} : vector<2x256xf32> to vector<2x237xf32>
    %334 = tpu.concatenate %333, %332 in 1 : vector<2x237xf32>, vector<2x19xf32> -> vector<2x256xf32>
    %335 = vector.broadcast %331 : vector<2x1xf32> to vector<2x256xf32>
    %336 = arith.mulf %335, %334 : vector<2x256xf32>
    %337 = arith.addf %330, %336 : vector<2x256xf32>
    %338 = vector.extract_strided_slice %94 {offsets = [0, 35], sizes = [2, 1], strides = [1, 1]} : vector<2x49xf32> to vector<2x1xf32>
    %cst_69 = arith.constant 0.000000e+00 : f32
    %339 = vector.broadcast %cst_69 : f32 to vector<2x29xf32>
    %340 = vector.extract_strided_slice %63 {offsets = [0, 29], sizes = [2, 227], strides = [1, 1]} : vector<2x256xf32> to vector<2x227xf32>
    %341 = tpu.concatenate %340, %339 in 1 : vector<2x227xf32>, vector<2x29xf32> -> vector<2x256xf32>
    %342 = vector.broadcast %338 : vector<2x1xf32> to vector<2x256xf32>
    %343 = arith.mulf %342, %341 : vector<2x256xf32>
    %344 = arith.addf %337, %343 : vector<2x256xf32>
    %345 = vector.extract_strided_slice %94 {offsets = [0, 36], sizes = [2, 1], strides = [1, 1]} : vector<2x49xf32> to vector<2x1xf32>
    %cst_70 = arith.constant 0.000000e+00 : f32
    %346 = vector.broadcast %cst_70 : f32 to vector<2x30xf32>
    %347 = vector.extract_strided_slice %69 {offsets = [0, 30], sizes = [2, 226], strides = [1, 1]} : vector<2x256xf32> to vector<2x226xf32>
    %348 = tpu.concatenate %347, %346 in 1 : vector<2x226xf32>, vector<2x30xf32> -> vector<2x256xf32>
    %349 = vector.broadcast %345 : vector<2x1xf32> to vector<2x256xf32>
    %350 = arith.mulf %349, %348 : vector<2x256xf32>
    %351 = arith.addf %344, %350 : vector<2x256xf32>
    %352 = vector.extract_strided_slice %94 {offsets = [0, 37], sizes = [2, 1], strides = [1, 1]} : vector<2x49xf32> to vector<2x1xf32>
    %cst_71 = arith.constant 0.000000e+00 : f32
    %353 = vector.broadcast %cst_71 : f32 to vector<2x31xf32>
    %354 = vector.extract_strided_slice %75 {offsets = [0, 31], sizes = [2, 225], strides = [1, 1]} : vector<2x256xf32> to vector<2x225xf32>
    %355 = tpu.concatenate %354, %353 in 1 : vector<2x225xf32>, vector<2x31xf32> -> vector<2x256xf32>
    %356 = vector.broadcast %352 : vector<2x1xf32> to vector<2x256xf32>
    %357 = arith.mulf %356, %355 : vector<2x256xf32>
    %358 = arith.addf %351, %357 : vector<2x256xf32>
    %359 = vector.extract_strided_slice %94 {offsets = [0, 38], sizes = [2, 1], strides = [1, 1]} : vector<2x49xf32> to vector<2x1xf32>
    %cst_72 = arith.constant 0.000000e+00 : f32
    %360 = vector.broadcast %cst_72 : f32 to vector<2x32xf32>
    %361 = vector.extract_strided_slice %40 {offsets = [0, 32], sizes = [2, 224], strides = [1, 1]} : vector<2x256xf32> to vector<2x224xf32>
    %362 = tpu.concatenate %361, %360 in 1 : vector<2x224xf32>, vector<2x32xf32> -> vector<2x256xf32>
    %363 = vector.broadcast %359 : vector<2x1xf32> to vector<2x256xf32>
    %364 = arith.mulf %363, %362 : vector<2x256xf32>
    %365 = arith.addf %358, %364 : vector<2x256xf32>
    %366 = vector.extract_strided_slice %94 {offsets = [0, 39], sizes = [2, 1], strides = [1, 1]} : vector<2x49xf32> to vector<2x1xf32>
    %cst_73 = arith.constant 0.000000e+00 : f32
    %367 = vector.broadcast %cst_73 : f32 to vector<2x33xf32>
    %368 = vector.extract_strided_slice %81 {offsets = [0, 33], sizes = [2, 223], strides = [1, 1]} : vector<2x256xf32> to vector<2x223xf32>
    %369 = tpu.concatenate %368, %367 in 1 : vector<2x223xf32>, vector<2x33xf32> -> vector<2x256xf32>
    %370 = vector.broadcast %366 : vector<2x1xf32> to vector<2x256xf32>
    %371 = arith.mulf %370, %369 : vector<2x256xf32>
    %372 = arith.addf %365, %371 : vector<2x256xf32>
    %373 = vector.extract_strided_slice %94 {offsets = [0, 40], sizes = [2, 1], strides = [1, 1]} : vector<2x49xf32> to vector<2x1xf32>
    %cst_74 = arith.constant 0.000000e+00 : f32
    %374 = vector.broadcast %cst_74 : f32 to vector<2x34xf32>
    %375 = vector.extract_strided_slice %87 {offsets = [0, 34], sizes = [2, 222], strides = [1, 1]} : vector<2x256xf32> to vector<2x222xf32>
    %376 = tpu.concatenate %375, %374 in 1 : vector<2x222xf32>, vector<2x34xf32> -> vector<2x256xf32>
    %377 = vector.broadcast %373 : vector<2x1xf32> to vector<2x256xf32>
    %378 = arith.mulf %377, %376 : vector<2x256xf32>
    %379 = arith.addf %372, %378 : vector<2x256xf32>
    %380 = vector.extract_strided_slice %94 {offsets = [0, 41], sizes = [2, 1], strides = [1, 1]} : vector<2x49xf32> to vector<2x1xf32>
    %cst_75 = arith.constant 0.000000e+00 : f32
    %381 = vector.broadcast %cst_75 : f32 to vector<2x35xf32>
    %382 = vector.extract_strided_slice %93 {offsets = [0, 35], sizes = [2, 221], strides = [1, 1]} : vector<2x256xf32> to vector<2x221xf32>
    %383 = tpu.concatenate %382, %381 in 1 : vector<2x221xf32>, vector<2x35xf32> -> vector<2x256xf32>
    %384 = vector.broadcast %380 : vector<2x1xf32> to vector<2x256xf32>
    %385 = arith.mulf %384, %383 : vector<2x256xf32>
    %386 = arith.addf %379, %385 : vector<2x256xf32>
    %387 = vector.extract_strided_slice %94 {offsets = [0, 42], sizes = [2, 1], strides = [1, 1]} : vector<2x49xf32> to vector<2x1xf32>
    %cst_76 = arith.constant 0.000000e+00 : f32
    %388 = vector.broadcast %cst_76 : f32 to vector<2x45xf32>
    %389 = vector.extract_strided_slice %63 {offsets = [0, 45], sizes = [2, 211], strides = [1, 1]} : vector<2x256xf32> to vector<2x211xf32>
    %390 = tpu.concatenate %389, %388 in 1 : vector<2x211xf32>, vector<2x45xf32> -> vector<2x256xf32>
    %391 = vector.broadcast %387 : vector<2x1xf32> to vector<2x256xf32>
    %392 = arith.mulf %391, %390 : vector<2x256xf32>
    %393 = arith.addf %386, %392 : vector<2x256xf32>
    %394 = vector.extract_strided_slice %94 {offsets = [0, 43], sizes = [2, 1], strides = [1, 1]} : vector<2x49xf32> to vector<2x1xf32>
    %cst_77 = arith.constant 0.000000e+00 : f32
    %395 = vector.broadcast %cst_77 : f32 to vector<2x46xf32>
    %396 = vector.extract_strided_slice %69 {offsets = [0, 46], sizes = [2, 210], strides = [1, 1]} : vector<2x256xf32> to vector<2x210xf32>
    %397 = tpu.concatenate %396, %395 in 1 : vector<2x210xf32>, vector<2x46xf32> -> vector<2x256xf32>
    %398 = vector.broadcast %394 : vector<2x1xf32> to vector<2x256xf32>
    %399 = arith.mulf %398, %397 : vector<2x256xf32>
    %400 = arith.addf %393, %399 : vector<2x256xf32>
    %401 = vector.extract_strided_slice %94 {offsets = [0, 44], sizes = [2, 1], strides = [1, 1]} : vector<2x49xf32> to vector<2x1xf32>
    %cst_78 = arith.constant 0.000000e+00 : f32
    %402 = vector.broadcast %cst_78 : f32 to vector<2x47xf32>
    %403 = vector.extract_strided_slice %75 {offsets = [0, 47], sizes = [2, 209], strides = [1, 1]} : vector<2x256xf32> to vector<2x209xf32>
    %404 = tpu.concatenate %403, %402 in 1 : vector<2x209xf32>, vector<2x47xf32> -> vector<2x256xf32>
    %405 = vector.broadcast %401 : vector<2x1xf32> to vector<2x256xf32>
    %406 = arith.mulf %405, %404 : vector<2x256xf32>
    %407 = arith.addf %400, %406 : vector<2x256xf32>
    %408 = vector.extract_strided_slice %94 {offsets = [0, 45], sizes = [2, 1], strides = [1, 1]} : vector<2x49xf32> to vector<2x1xf32>
    %cst_79 = arith.constant 0.000000e+00 : f32
    %409 = vector.broadcast %cst_79 : f32 to vector<2x48xf32>
    %410 = vector.extract_strided_slice %40 {offsets = [0, 48], sizes = [2, 208], strides = [1, 1]} : vector<2x256xf32> to vector<2x208xf32>
    %411 = tpu.concatenate %410, %409 in 1 : vector<2x208xf32>, vector<2x48xf32> -> vector<2x256xf32>
    %412 = vector.broadcast %408 : vector<2x1xf32> to vector<2x256xf32>
    %413 = arith.mulf %412, %411 : vector<2x256xf32>
    %414 = arith.addf %407, %413 : vector<2x256xf32>
    %415 = vector.extract_strided_slice %94 {offsets = [0, 46], sizes = [2, 1], strides = [1, 1]} : vector<2x49xf32> to vector<2x1xf32>
    %cst_80 = arith.constant 0.000000e+00 : f32
    %416 = vector.broadcast %cst_80 : f32 to vector<2x49xf32>
    %417 = vector.extract_strided_slice %81 {offsets = [0, 49], sizes = [2, 207], strides = [1, 1]} : vector<2x256xf32> to vector<2x207xf32>
    %418 = tpu.concatenate %417, %416 in 1 : vector<2x207xf32>, vector<2x49xf32> -> vector<2x256xf32>
    %419 = vector.broadcast %415 : vector<2x1xf32> to vector<2x256xf32>
    %420 = arith.mulf %419, %418 : vector<2x256xf32>
    %421 = arith.addf %414, %420 : vector<2x256xf32>
    %422 = vector.extract_strided_slice %94 {offsets = [0, 47], sizes = [2, 1], strides = [1, 1]} : vector<2x49xf32> to vector<2x1xf32>
    %cst_81 = arith.constant 0.000000e+00 : f32
    %423 = vector.broadcast %cst_81 : f32 to vector<2x50xf32>
    %424 = vector.extract_strided_slice %87 {offsets = [0, 50], sizes = [2, 206], strides = [1, 1]} : vector<2x256xf32> to vector<2x206xf32>
    %425 = tpu.concatenate %424, %423 in 1 : vector<2x206xf32>, vector<2x50xf32> -> vector<2x256xf32>
    %426 = vector.broadcast %422 : vector<2x1xf32> to vector<2x256xf32>
    %427 = arith.mulf %426, %425 : vector<2x256xf32>
    %428 = arith.addf %421, %427 : vector<2x256xf32>
    %429 = vector.extract_strided_slice %94 {offsets = [0, 48], sizes = [2, 1], strides = [1, 1]} : vector<2x49xf32> to vector<2x1xf32>
    %cst_82 = arith.constant 0.000000e+00 : f32
    %430 = vector.broadcast %cst_82 : f32 to vector<2x51xf32>
    %431 = vector.extract_strided_slice %93 {offsets = [0, 51], sizes = [2, 205], strides = [1, 1]} : vector<2x256xf32> to vector<2x205xf32>
    %432 = tpu.concatenate %431, %430 in 1 : vector<2x205xf32>, vector<2x51xf32> -> vector<2x256xf32>
    %433 = vector.broadcast %429 : vector<2x1xf32> to vector<2x256xf32>
    %434 = arith.mulf %433, %432 : vector<2x256xf32>
    %435 = arith.addf %428, %434 : vector<2x256xf32>
    %436 = vector.extract_strided_slice %435 {offsets = [0, 0], sizes = [1, 256], strides = [1, 1]} : vector<2x256xf32> to vector<1x256xf32>
    %437 = vector.extract_strided_slice %435 {offsets = [1, 0], sizes = [1, 256], strides = [1, 1]} : vector<2x256xf32> to vector<1x256xf32>
    %438 = arith.addf %436, %437 : vector<1x256xf32>
    %c0_83 = arith.constant 0 : index
    %439 = memref.load %arg7[%c0_83] : memref<1xf32, #tpu.memory_space<smem>>
    %440 = vector.broadcast %439 : f32 to vector<1x256xf32>
    %441 = arith.addf %438, %440 : vector<1x256xf32>
    %442 = arith.negf %441 : vector<1x256xf32>
    %443 = math.exp %442 : vector<1x256xf32>
    %cst_84 = arith.constant 1.000000e+00 : f32
    %444 = vector.broadcast %cst_84 : f32 to vector<1x256xf32>
    %445 = arith.addf %444, %443 : vector<1x256xf32>
    %446 = arith.divf %444, %445 : vector<1x256xf32>
    %c0_85 = arith.constant 0 : index
    %c0_86 = arith.constant 0 : index
    %c0_87 = arith.constant 0 : index
    %447 = vector.load %arg8[%c0_85, %c0_86, %c0_87] : memref<1x32x256xf32, #tpu.memory_space<vmem>>, vector<1x32x256xf32>
    %448 = vector.shape_cast %447 : vector<1x32x256xf32> to vector<32x256xf32>
    %449 = vector.broadcast %446 : vector<1x256xf32> to vector<32x256xf32>
    %450 = arith.mulf %448, %449 : vector<32x256xf32>
    %c0_88 = arith.constant 0 : index
    %c0_89 = arith.constant 0 : index
    %c0_90 = arith.constant 0 : index
    %451 = vector.load %arg8[%c0_88, %c0_89, %c0_90] : memref<1x32x256xf32, #tpu.memory_space<vmem>>, vector<1x32x256xf32>
    %452 = vector.shape_cast %451 : vector<1x32x256xf32> to vector<32x256xf32>
    %453 = vector.shape_cast %450 : vector<32x256xf32> to vector<1x32x256xf32>
    tpu.vector_store %arg8[%c0_88, %c0_89, %c0_90], %453 {strides = array<i32>} : memref<1x32x256xf32, #tpu.memory_space<vmem>>, vector<1x32x256xf32>,
    return
  }
  func.func @transform_0(%arg0: i32) -> (i32, i32, i32) {
    %c0_i32 = arith.constant 0 : i32
    %c0_i32_0 = arith.constant 0 : i32
    %c0_i32_1 = arith.constant 0 : i32
    return %arg0, %c0_i32, %c0_i32_0 : i32, i32, i32
  }
  func.func @transform_1(%arg0: i32) -> (i32, i32) {
    %c0_i32 = arith.constant 0 : i32
    %c0_i32_0 = arith.constant 0 : i32
    %c0_i32_1 = arith.constant 0 : i32
    return %c0_i32, %c0_i32_0 : i32, i32
  }
  func.func @transform_2(%arg0: i32) -> (i32, i32) {
    %c0_i32 = arith.constant 0 : i32
    %c0_i32_0 = arith.constant 0 : i32
    %c0_i32_1 = arith.constant 0 : i32
    return %c0_i32, %c0_i32_0 : i32, i32
  }
  func.func @transform_3(%arg0: i32) -> (i32, i32) {
    %c0_i32 = arith.constant 0 : i32
    %c0_i32_0 = arith.constant 0 : i32
    %c0_i32_1 = arith.constant 0 : i32
    return %c0_i32, %c0_i32_0 : i32, i32
  }
  func.func @transform_4(%arg0: i32) -> (i32, i32) {
    %c0_i32 = arith.constant 0 : i32
    %c0_i32_0 = arith.constant 0 : i32
    %c0_i32_1 = arith.constant 0 : i32
    return %c0_i32, %c0_i32_0 : i32, i32
  }
  func.func @transform_5(%arg0: i32) -> (i32, i32) {
    %c0_i32 = arith.constant 0 : i32
    %c0_i32_0 = arith.constant 0 : i32
    %c0_i32_1 = arith.constant 0 : i32
    return %c0_i32, %c0_i32_0 : i32, i32
  }
  func.func @transform_6(%arg0: i32) -> i32 {
    %c0_i32 = arith.constant 0 : i32
    %c0_i32_0 = arith.constant 0 : i32
    return %c0_i32 : i32
  }
  func.func @transform_7(%arg0: i32) -> (i32, i32, i32) {
    %c0_i32 = arith.constant 0 : i32
    %c0_i32_0 = arith.constant 0 : i32
    %c0_i32_1 = arith.constant 0 : i32
    return %arg0, %c0_i32, %c0_i32_0 : i32, i32, i32
  }
}

</mosaic_0001>

<llo_original>
// kernel: tpu_custom_call.1
$region0: #{tpu_custom_call.1}
  #allocation0 [shape = 'u32[]', space=smem, size = 0x4, offset = 0x4, fixed_abs, tag = 'smem constant byte address 0x4 - core index']
  #allocation1 [shape = 'u32[144,128]{1,0:T(1,128)}', space=vmem, size = 0x12000, scoped, tag = 'internal scratch']
  #allocation2 [shape = 'f32[1]{0:T(128)S(6)}', space=smem, size = 0x200, scoped, tag = 'scoped memory for tpu_custom_call.1']
  %s0 = inlined_call_operand.hbm [shape: f32[2,32,256], index: 0, kind: input, shape index: {}]
  %s1 = inlined_call_operand.vmem [shape: f32[4,32], index: 1, kind: input, shape index: {}]
  %s2 = inlined_call_operand.vmem [shape: f32[4,1], index: 2, kind: input, shape index: {}]
  %s3 = inlined_call_operand.vmem [shape: f32[32,4], index: 3, kind: input, shape index: {}]
  %s4 = inlined_call_operand.vmem [shape: f32[32,1], index: 4, kind: input, shape index: {}]
  %s5 = inlined_call_operand.vmem [shape: f32[2,49], index: 5, kind: input, shape index: {}]
  %s6 = inlined_call_operand.<no memory space> [shape: f32[1], index: 6, kind: input, shape index: {}]
  %s7 = inlined_call_operand.hbm [shape: f32[2,32,256], index: 7, kind: output, shape index: {}]
  %s8 = sld [smem:[#allocation0]]
  $region65: #{tpu_custom_call.1} parent=0
    _
  %s10 = ssub.s32 1, %s8
  %s11 = scalar_select 0, %s10, %s8
  %12 = sst [smem:[#allocation2]] %s6
  $region1: #{tpu_custom_call.1} parent=0
    #allocation3 [shape = 'u8[65536]{0}', space=vmem, size = 0x10000, scoped, tag = 'input window, operand 0']
    #allocation4 [shape = 's32[2]{0}', space=sflag, size = 0x8, scoped, tag = 'scoped memory for tpu_custom_call.1']
    #allocation5 [shape = 's32[2]{0}', space=sflag, size = 0x8, scoped, tag = 'scoped memory for tpu_custom_call.1']
    #allocation6 [shape = 'u8[65536]{0}', space=vmem, size = 0x10000, scoped, tag = 'output window, operand 0']
    %13 = vsyncpa [#allocation4], 0
    %s14 = scalar_lea.sflag [#allocation4], 1
    %15 = vsyncpa %s14, 0
    %16 = vsyncpa [#allocation5], 0
    %s17 = scalar_lea.sflag [#allocation5], 1
    %18 = vsyncpa %s17, 0
    loop: start=0, step=1, limit=4
    $region2: #{tpu_custom_call.1} parent=1 // loop_pre_header
      _
    $region3: #{tpu_custom_call.1} parent=1 // loop_header
      %s20 = sphi 0, %s24
      %p21 = scmp.ge.s32.totalorder %s20, 4
      %s30 = sphi 0, %s32
      %s33 = sphi 0, %s30
      %s34 = sphi 0, %s33
      %s50 = sphi 0, %s34
      %s54 = sphi 0, %s54
      %s56 = sphi 0, %s54
      %s57 = sphi 0, %s56
      %s71 = sphi 0, %s57
      %s75 = sphi 0, %s75
      %s77 = sphi 0, %s75
      %s78 = sphi 0, %s77
      %s92 = sphi 0, %s78
      %s96 = sphi 0, %s96
      %s98 = sphi 0, %s96
      %s99 = sphi 0, %s98
      %s113 = sphi 0, %s99
      %s117 = sphi 0, %s117
      %s119 = sphi 0, %s117
      %s120 = sphi 0, %s119
      %s134 = sphi 0, %s120
      %s138 = sphi 0, %s138
      %s140 = sphi 0, %s138
      %s141 = sphi 0, %s140
      %s155 = sphi 0, %s141
      %s159 = sphi 0, %s159
      %s161 = sphi 0, %s159
      %s162 = sphi 0, %s161
      %s176 = sphi 0, %s162
      %s182 = sphi 0, %s184
      %s185 = sphi 0, %s182
      %s186 = sphi 0, %s185
      %s202 = sphi 0, %s186
    $region4: #{tpu_custom_call.1} parent=1 // loop_header_branch
      %23 = sbr.rel (%p21) target = $region8
    $region5: #{tpu_custom_call.1} parent=1 // loop_body
      %s25 = ssub.s32 %s20, 1
      %s26 = ssub.s32 %s20, 2
      %s27 = sadd.s32 %s20, 1
      %s28 = ssub.s32 %s20, %s27
      %p29 = scmp.eq.s32.totalorder %s28, 0
      %s31 = sadd.s32 %s30, 1
      %s32 = scalar_select %p29, %s30, %s31
      %p35 = pneg %p29
      %p36 = scmp.eq.s32.totalorder %s20, 1
      %p37 = por %p35, %p36
      %p38 = scmp.ne.s32.totalorder %s30, %s33
      %p39 = scmp.eq.s32.totalorder %s20, 0
      %p40 = por %p38, %p39
      %p41 = scmp.ne.s32.totalorder %s30, %s33
      %p42 = scmp.eq.s32.totalorder %s25, 1
      %p43 = por %p41, %p42
      %p44 = scmp.ne.s32.totalorder %s33, %s34
      %p45 = scmp.eq.s32.totalorder %s25, 0
      %p46 = por %p44, %p45
      %p47 = scmp.ne.s32.totalorder %s33, %s34
      %p48 = scmp.eq.s32.totalorder %s26, 1
      %p49 = por %p47, %p48
      %p51 = scmp.ne.s32.totalorder %s34, %s50
      %p52 = scmp.eq.s32.totalorder %s26, 0
      %p53 = por %p51, %p52
      %s55 = sadd.s32 %s54, 1
      %p58 = scmp.eq.s32.totalorder %s20, 1
      %p59 = scmp.ne.s32.totalorder %s54, %s56
      %p60 = scmp.eq.s32.totalorder %s20, 0
      %p61 = por %p59, %p60
      %p62 = scmp.ne.s32.totalorder %s54, %s56
      %p63 = scmp.eq.s32.totalorder %s25, 1
      %p64 = por %p62, %p63
      %p65 = scmp.ne.s32.totalorder %s56, %s57
      %p66 = scmp.eq.s32.totalorder %s25, 0
      %p67 = por %p65, %p66
      %p68 = scmp.ne.s32.totalorder %s56, %s57
      %p69 = scmp.eq.s32.totalorder %s26, 1
      %p70 = por %p68, %p69
      %p72 = scmp.ne.s32.totalorder %s57, %s71
      %p73 = scmp.eq.s32.totalorder %s26, 0
      %p74 = por %p72, %p73
      %s76 = sadd.s32 %s75, 1
      %p79 = scmp.eq.s32.totalorder %s20, 1
      %p80 = scmp.ne.s32.totalorder %s75, %s77
      %p81 = scmp.eq.s32.totalorder %s20, 0
      %p82 = por %p80, %p81
      %p83 = scmp.ne.s32.totalorder %s75, %s77
      %p84 = scmp.eq.s32.totalorder %s25, 1
      %p85 = por %p83, %p84
      %p86 = scmp.ne.s32.totalorder %s77, %s78
      %p87 = scmp.eq.s32.totalorder %s25, 0
      %p88 = por %p86, %p87
      %p89 = scmp.ne.s32.totalorder %s77, %s78
      %p90 = scmp.eq.s32.totalorder %s26, 1
      %p91 = por %p89, %p90
      %p93 = scmp.ne.s32.totalorder %s78, %s92
      %p94 = scmp.eq.s32.totalorder %s26, 0
      %p95 = por %p93, %p94
      %s97 = sadd.s32 %s96, 1
      %p100 = scmp.eq.s32.totalorder %s20, 1
      %p101 = scmp.ne.s32.totalorder %s96, %s98
      %p102 = scmp.eq.s32.totalorder %s20, 0
      %p103 = por %p101, %p102
      %p104 = scmp.ne.s32.totalorder %s96, %s98
      %p105 = scmp.eq.s32.totalorder %s25, 1
      %p106 = por %p104, %p105
      %p107 = scmp.ne.s32.totalorder %s98, %s99
      %p108 = scmp.eq.s32.totalorder %s25, 0
      %p109 = por %p107, %p108
      %p110 = scmp.ne.s32.totalorder %s98, %s99
      %p111 = scmp.eq.s32.totalorder %s26, 1
      %p112 = por %p110, %p111
      %p114 = scmp.ne.s32.totalorder %s99, %s113
      %p115 = scmp.eq.s32.totalorder %s26, 0
      %p116 = por %p114, %p115
      %s118 = sadd.s32 %s117, 1
      %p121 = scmp.eq.s32.totalorder %s20, 1
      %p122 = scmp.ne.s32.totalorder %s117, %s119
      %p123 = scmp.eq.s32.totalorder %s20, 0
      %p124 = por %p122, %p123
      %p125 = scmp.ne.s32.totalorder %s117, %s119
      %p126 = scmp.eq.s32.totalorder %s25, 1
      %p127 = por %p125, %p126
      %p128 = scmp.ne.s32.totalorder %s119, %s120
      %p129 = scmp.eq.s32.totalorder %s25, 0
      %p130 = por %p128, %p129
      %p131 = scmp.ne.s32.totalorder %s119, %s120
      %p132 = scmp.eq.s32.totalorder %s26, 1
      %p133 = por %p131, %p132
      %p135 = scmp.ne.s32.totalorder %s120, %s134
      %p136 = scmp.eq.s32.totalorder %s26, 0
      %p137 = por %p135, %p136
      %s139 = sadd.s32 %s138, 1
      %p142 = scmp.eq.s32.totalorder %s20, 1
      %p143 = scmp.ne.s32.totalorder %s138, %s140
      %p144 = scmp.eq.s32.totalorder %s20, 0
      %p145 = por %p143, %p144
      %p146 = scmp.ne.s32.totalorder %s138, %s140
      %p147 = scmp.eq.s32.totalorder %s25, 1
      %p148 = por %p146, %p147
      %p149 = scmp.ne.s32.totalorder %s140, %s141
      %p150 = scmp.eq.s32.totalorder %s25, 0
      %p151 = por %p149, %p150
      %p152 = scmp.ne.s32.totalorder %s140, %s141
      %p153 = scmp.eq.s32.totalorder %s26, 1
      %p154 = por %p152, %p153
      %p156 = scmp.ne.s32.totalorder %s141, %s155
      %p157 = scmp.eq.s32.totalorder %s26, 0
      %p158 = por %p156, %p157
      %s160 = sadd.s32 %s159, 1
      %p163 = scmp.eq.s32.totalorder %s20, 1
      %p164 = scmp.ne.s32.totalorder %s159, %s161
      %p165 = scmp.eq.s32.totalorder %s20, 0
      %p166 = por %p164, %p165
      %p167 = scmp.ne.s32.totalorder %s159, %s161
      %p168 = scmp.eq.s32.totalorder %s25, 1
      %p169 = por %p167, %p168
      %p170 = scmp.ne.s32.totalorder %s161, %s162
      %p171 = scmp.eq.s32.totalorder %s25, 0
      %p172 = por %p170, %p171
      %p173 = scmp.ne.s32.totalorder %s161, %s162
      %p174 = scmp.eq.s32.totalorder %s26, 1
      %p175 = por %p173, %p174
      %p177 = scmp.ne.s32.totalorder %s162, %s176
      %p178 = scmp.eq.s32.totalorder %s26, 0
      %p179 = por %p177, %p178
      %s180 = ssub.s32 %s20, %s27
      %p181 = scmp.eq.s32.totalorder %s180, 0
      %s183 = sadd.s32 %s182, 1
      %s184 = scalar_select %p181, %s182, %s183
      %p187 = pneg %p181
      %p188 = scmp.eq.s32.totalorder %s20, 1
      %p189 = por %p187, %p188
      %p190 = scmp.ne.s32.totalorder %s182, %s185
      %p191 = scmp.eq.s32.totalorder %s20, 0
      %p192 = por %p190, %p191
      %p193 = scmp.ne.s32.totalorder %s182, %s185
      %p194 = scmp.eq.s32.totalorder %s25, 1
      %p195 = por %p193, %p194
      %p196 = scmp.ne.s32.totalorder %s185, %s186
      %p197 = scmp.eq.s32.totalorder %s25, 0
      %p198 = por %p196, %p197
      %p199 = scmp.ne.s32.totalorder %s185, %s186
      %p200 = scmp.eq.s32.totalorder %s26, 1
      %p201 = por %p199, %p200
      %p203 = scmp.ne.s32.totalorder %s186, %s202
      %p204 = scmp.eq.s32.totalorder %s26, 0
      %p205 = por %p203, %p204
      %p206 = scmp.le.s32.totalorder 1, %s20
      %p207 = scmp.lt.s32.totalorder %s20, 3
      %p208 = pnand %p206, %p207
      %p209 = pneg %p208
      // Predicated region
      $region9: #{tpu_custom_call.1} parent=5 // pred_check
        _
      $region10: #{tpu_custom_call.1} parent=5 // pred_check_branch
        %211 = sbr.rel (%p208) target = $region12
      $region11: #{tpu_custom_call.1} parent=5 // pred_region
        %s212 = ssub.s32 %s20, 1
        // Predicated region
        $region13: #{tpu_custom_call.1} parent=11 // pred_check
          %p213 = pneg %p67
        $region14: #{tpu_custom_call.1} parent=11 // pred_check_branch
          %215 = sbr.rel (%p213) target = $region16
        $region15: #{tpu_custom_call.1} parent=11 // pred_region
          _
        $region16: #{tpu_custom_call.1} parent=11 // pred_fallthru
          _
        // Predicated region
        $region17: #{tpu_custom_call.1} parent=11 // pred_check
          %p216 = pneg %p88
        $region18: #{tpu_custom_call.1} parent=11 // pred_check_branch
          %218 = sbr.rel (%p216) target = $region20
        $region19: #{tpu_custom_call.1} parent=11 // pred_region
          _
        $region20: #{tpu_custom_call.1} parent=11 // pred_fallthru
          _
        // Predicated region
        $region21: #{tpu_custom_call.1} parent=11 // pred_check
          %p219 = pneg %p109
        $region22: #{tpu_custom_call.1} parent=11 // pred_check_branch
          %221 = sbr.rel (%p219) target = $region24
        $region23: #{tpu_custom_call.1} parent=11 // pred_region
          _
        $region24: #{tpu_custom_call.1} parent=11 // pred_fallthru
          _
        // Predicated region
        $region25: #{tpu_custom_call.1} parent=11 // pred_check
          %p222 = pneg %p130
        $region26: #{tpu_custom_call.1} parent=11 // pred_check_branch
          %224 = sbr.rel (%p222) target = $region28
        $region27: #{tpu_custom_call.1} parent=11 // pred_region
          _
        $region28: #{tpu_custom_call.1} parent=11 // pred_fallthru
          _
        // Predicated region
        $region29: #{tpu_custom_call.1} parent=11 // pred_check
          %p225 = pneg %p151
        $region30: #{tpu_custom_call.1} parent=11 // pred_check_branch
          %227 = sbr.rel (%p225) target = $region32
        $region31: #{tpu_custom_call.1} parent=11 // pred_region
          _
        $region32: #{tpu_custom_call.1} parent=11 // pred_fallthru
          _
        // Predicated region
        $region33: #{tpu_custom_call.1} parent=11 // pred_check
          %p228 = pneg %p172
        $region34: #{tpu_custom_call.1} parent=11 // pred_check_branch
          %230 = sbr.rel (%p228) target = $region36
        $region35: #{tpu_custom_call.1} parent=11 // pred_region
          _
        $region36: #{tpu_custom_call.1} parent=11 // pred_fallthru
          _
      $region12: #{tpu_custom_call.1} parent=5 // pred_fallthru
        _
      %p231 = scmp.lt.s32.totalorder %s20, 2
      // Predicated region
      $region37: #{tpu_custom_call.1} parent=5 // pred_check
        %p232 = pneg %p231
      $region38: #{tpu_custom_call.1} parent=5 // pred_check_branch
        %234 = sbr.rel (%p232) target = $region40
      $region39: #{tpu_custom_call.1} parent=5 // pred_region
        // Predicated region
        $region41: #{tpu_custom_call.1} parent=39 // pred_check
          %p235 = pneg %p40
        $region42: #{tpu_custom_call.1} parent=39 // pred_check_branch
          %237 = sbr.rel (%p235) target = $region44
        $region43: #{tpu_custom_call.1} parent=39 // pred_region
          %s238 = sand.u32 %s30, 1
          %s239 = scalar_lea.sflag [#allocation4], %s238
          %s240 = sand.u32 %s30, 1
          %s241 = smul.addr %s240, 64
          %s242 = scalar_lea.vmem [#allocation3], %s241
          %s244 = ssub.s32 1024, 1024
          %245 = vsyncadd %s239, %s244
          %s246 = smul.addr %s20, 8
          %s247 = smul.addr %s246, 128
          %s248 = scalar_lea.hbm %s0, %s247
          %s249 = sshll.u32 %s242, 4
          %s250 = int_to_ptr.vmem [resolvable:$true] %s249
          %255 = dma.hbm_to_vmem [thread:$0]  %s248, 1024, %s250, %s239, 256, 256, 16
        $region44: #{tpu_custom_call.1} parent=39 // pred_fallthru
          _
      $region40: #{tpu_custom_call.1} parent=5 // pred_fallthru
        _
      %p256 = scmp.le.s32.totalorder 1, %s20
      %p257 = scmp.lt.s32.totalorder %s20, 3
      %p258 = pnand %p256, %p257
      %p259 = pneg %p258
      // Predicated region
      $region45: #{tpu_custom_call.1} parent=5 // pred_check
        _
      $region46: #{tpu_custom_call.1} parent=5 // pred_check_branch
        %261 = sbr.rel (%p258) target = $region48
      $region47: #{tpu_custom_call.1} parent=5 // pred_region
        %s262 = ssub.s32 %s20, 1
        %s263 = sand.u32 %s33, 1
        %s264 = scalar_lea.sflag [#allocation4], %s263
        %s265 = sand.u32 %s33, 1
        %s266 = smul.addr %s265, 64
        %s267 = scalar_lea.vmem [#allocation3], %s266
        // Predicated region
        $region49: #{tpu_custom_call.1} parent=47 // pred_check
          %p268 = pneg %p46
        $region50: #{tpu_custom_call.1} parent=47 // pred_check_branch
          %270 = sbr.rel (%p268) target = $region52
        $region51: #{tpu_custom_call.1} parent=47 // pred_region
          %271 = dma.done %s264, 1024
        $region52: #{tpu_custom_call.1} parent=47 // pred_fallthru
          _
        %s272 = sand.u32 %s33, 1
        %s273 = scalar_lea.sflag [#allocation4], %s272
        %s274 = sand.u32 %s33, 1
        %s275 = smul.addr %s274, 64
        %s276 = scalar_lea.vmem [#allocation3], %s275
        %p277 = pneg %p46
        %p278 = pneg %p43
        %p279 = pneg %p67
        %p280 = pneg %p64
        %p281 = pneg %p88
        %p282 = pneg %p85
        %p283 = pneg %p109
        %p284 = pneg %p106
        %p285 = pneg %p130
        %p286 = pneg %p127
        %p287 = pneg %p151
        %p288 = pneg %p148
        %p289 = pneg %p172
        %p290 = pneg %p169
        %p291 = pneg %p198
        %p292 = pneg %p195
        %s293 = sand.u32 %s185, 1
        %s294 = scalar_lea.sflag [#allocation5], %s293
        %s295 = sand.u32 %s185, 1
        %s296 = smul.addr %s295, 64
        %s297 = scalar_lea.vmem [#allocation6], %s296
        %v298 = vld [vmem:[%s267] sm:$0xff]
        %v299 = vld [vmem:[%s267 + $0x8] sm:$0xff]
        %v300 = vld [vmem:[%s267 + $0x10] sm:$0xff]
        %v301 = vld [vmem:[%s267 + $0x18] sm:$0xff]
        %v302 = vld [vmem:[%s267 + $0x20] sm:$0xff]
        %v303 = vld [vmem:[%s267 + $0x28] sm:$0xff]
        %v304 = vld [vmem:[%s267 + $0x30] sm:$0xff]
        %v305 = vld [vmem:[%s267 + $0x38] sm:$0xff]
        %v306 = vmax.f32 %v298, %v299
        %307 = vmax.xlane.f32.xlu0 %v306
        %v308 = vpop.xlane.xlu0 %307
        %v309 = vmax.f32 %v300, %v301
        %310 = vmax.xlane.f32.xlu0 %v309
        %v311 = vpop.xlane.xlu0 %310
        %v312 = vmax.f32 %v302, %v303
        %313 = vmax.xlane.f32.xlu0 %v312
        %v314 = vpop.xlane.xlu0 %313
        %v315 = vmax.f32 %v304, %v305
        %316 = vmax.xlane.f32.xlu0 %v315
        %v317 = vpop.xlane.xlu0 %316
        %v318 = vadd.f32 %v298, %v299
        %319 = vadd.xlane.f32.xlu0 %v318
        %v320 = vpop.xlane.xlu0 %319
        %v321 = vadd.f32 %v300, %v301
        %322 = vadd.xlane.f32.xlu0 %v321
        %v323 = vpop.xlane.xlu0 %322
        %v324 = vadd.f32 %v302, %v303
        %325 = vadd.xlane.f32.xlu0 %v324
        %v326 = vpop.xlane.xlu0 %325
        %v327 = vadd.f32 %v304, %v305
        %328 = vadd.xlane.f32.xlu0 %v327
        %v329 = vpop.xlane.xlu0 %328
        %v330 = vmul.f32 %v320, 0.00390625
        %v331 = vmul.f32 %v323, 0.00390625
        %v332 = vmul.f32 %v326, 0.00390625
        %v333 = vmul.f32 %v329, 0.00390625
        %vm334 = vcmask 7168
        %v335 = vsel %vm334, %v308, %v330
        %v336 = vsel %vm334, %v311, %v331
        %v337 = vsel %vm334, %v314, %v332
        %v338 = vsel %vm334, %v317, %v333
        %v339 = vld [vmem:[%s1] sm:$0xf]
        %v340 = vld [vmem:[%s2] sm:$0xf]
        %342 = vset.pattern.permute.xlu0 0
        %343 = vperm.xlu0 %342, %v340
        %v344 = vpop.permute.xlu0 %343
        %vm346 = vcmask 261120
        %v348 = vsel %vm346, %v339, 0
        %350 = vmatprep.subr.mxu0 0.0
        %351 = vmatpush1.msra.mxu0 %v335
        %352 = vmatprep.subr.mxu0 0.0
        %353 = vmatpush1.msra.mxu0 %v336
        %354 = vmatprep.subr.mxu0 0.0
        %355 = vmatpush1.msra.mxu0 %v337
        %356 = vmatprep.subr.mxu0 0.0
        %357 = vmatpush1.msra.mxu0 %v338
        %358 = vmatprep.subr.mxu0 0.0
        %359 = vmatpush1.msra.mxu0 0.0
        %360 = vmatprep.subr.mxu0 0.0
        %361 = vmatpush1.msra.mxu0 0.0
        %362 = vmatprep.subr.mxu0 0.0
        %363 = vmatpush1.msra.mxu0 0.0
        %364 = vmatprep.subr.mxu0 0.0
        %365 = vmatpush1.msra.mxu0 0.0
        %366 = vmatprep.subr.mxu0 0.0
        %367 = vmatpush1.msra.mxu0 0.0
        %368 = vmatprep.subr.mxu0 0.0
        %369 = vmatpush1.msra.mxu0 0.0
        %370 = vmatprep.subr.mxu0 0.0
        %371 = vmatpush1.msra.mxu0 0.0
        %372 = vmatprep.subr.mxu0 0.0
        %373 = vmatpush1.msra.mxu0 0.0
        %374 = vmatprep.subr.mxu0 0.0
        %375 = vmatpush1.msra.mxu0 0.0
        %376 = vmatprep.subr.mxu0 0.0
        %377 = vmatpush1.msra.mxu0 0.0
        %378 = vmatprep.subr.mxu0 0.0
        %379 = vmatpush1.msra.mxu0 0.0
        %380 = vmatprep.subr.mxu0 0.0
        %381 = vmatpush1.msra.mxu0 0.0
        %382 = vmatprep.subr.mxu0 0.0
        %383 = vmatpush1.msra.mxu0 0.0
        %384 = vmatprep.subr.mxu0 0.0
        %385 = vmatpush1.msra.mxu0 0.0
        %386 = vmatprep.subr.mxu0 0.0
        %387 = vmatpush1.msra.mxu0 0.0
        %388 = vmatprep.subr.mxu0 0.0
        %389 = vmatpush1.msra.mxu0 0.0
        %390 = vmatprep.subr.mxu0 0.0
        %391 = vmatpush1.msra.mxu0 0.0
        %392 = vmatprep.subr.mxu0 0.0
        %393 = vmatpush1.msra.mxu0 0.0
        %394 = vmatprep.subr.mxu0 0.0
        %395 = vmatpush1.msra.mxu0 0.0
        %396 = vmatprep.subr.mxu0 0.0
        %397 = vmatpush1.msra.mxu0 0.0
        %398 = vmatprep.subr.mxu0 0.0
        %399 = vmatpush1.msra.mxu0 0.0
        %400 = vmatprep.subr.mxu0 0.0
        %401 = vmatpush1.msra.mxu0 0.0
        %402 = vmatprep.subr.mxu0 0.0
        %403 = vmatpush1.msra.mxu0 0.0
        %404 = vmatprep.subr.mxu0 0.0
        %405 = vmatpush1.msra.mxu0 0.0
        %406 = vmatprep.subr.mxu0 0.0
        %407 = vmatpush1.msra.mxu0 0.0
        %408 = vmatprep.subr.mxu0 0.0
        %409 = vmatpush1.msra.mxu0 0.0
        %410 = vmatprep.subr.mxu0 0.0
        %411 = vmatpush1.msra.mxu0 0.0
        %412 = vmatprep.subr.mxu0 0.0
        %413 = vmatpush1.msra.mxu0 0.0
        %414 = vmatprep.mubr.f32.mxu0 0.0
        %415 = vmatmul.mubr.f32.gmra.mrb[0].mxu0 %v348
        %v416 = vpop.f32.mrb[0].mxu0
        %v417 = vadd.f32 %v344, %v416
        %v418 = vpop.f32.mrb[0].mxu0
        %419 = vdwg.mxu0
        %v420 = vmax.f32 %v417, 0.0
        %v421 = vld [vmem:[%s3] sm:$0xff]
        %v422 = vld [vmem:[%s3 + $0x8] sm:$0xff]
        %v423 = vld [vmem:[%s3 + $0x10] sm:$0xff]
        %v424 = vld [vmem:[%s3 + $0x18] sm:$0xff]
        %v425 = vld [vmem:[%s4] sm:$0xff]
        %v426 = vld [vmem:[%s4 + $0x8] sm:$0xff]
        %v427 = vld [vmem:[%s4 + $0x10] sm:$0xff]
        %v428 = vld [vmem:[%s4 + $0x18] sm:$0xff]
        %430 = vset.pattern.permute.xlu0 0
        %431 = vperm.xlu0 %430, %v425
        %v432 = vpop.permute.xlu0 %431
        %435 = vset.pattern.permute.xlu0 0
        %436 = vperm.xlu0 %435, %v426
        %v437 = vpop.permute.xlu0 %436
        %440 = vset.pattern.permute.xlu0 0
        %441 = vperm.xlu0 %440, %v427
        %v442 = vpop.permute.xlu0 %441
        %445 = vset.pattern.permute.xlu0 0
        %446 = vperm.xlu0 %445, %v428
        %v447 = vpop.permute.xlu0 %446
        %vm449 = vcmask 31744
        %v451 = vsel %vm449, %v421, 0
        %v454 = vsel %vm449, %v422, 0
        %v457 = vsel %vm449, %v423, 0
        %v460 = vsel %vm449, %v424, 0
        %vm462 = vcmask 1043456
        %v464 = vsel %vm462, %v420, 0
        %466 = vmatprep.subr.mxu0 0.0
        %467 = vmatpush1.msra.mxu0 %v464
        %468 = vmatprep.subr.mxu0 0.0
        %469 = vmatpush1.msra.mxu0 0.0
        %470 = vmatprep.subr.mxu0 0.0
        %471 = vmatpush1.msra.mxu0 0.0
        %472 = vmatprep.subr.mxu0 0.0
        %473 = vmatpush1.msra.mxu0 0.0
        %474 = vmatprep.subr.mxu0 0.0
        %475 = vmatpush1.msra.mxu0 0.0
        %476 = vmatprep.subr.mxu0 0.0
        %477 = vmatpush1.msra.mxu0 0.0
        %478 = vmatprep.subr.mxu0 0.0
        %479 = vmatpush1.msra.mxu0 0.0
        %480 = vmatprep.subr.mxu0 0.0
        %481 = vmatpush1.msra.mxu0 0.0
        %482 = vmatprep.subr.mxu0 0.0
        %483 = vmatpush1.msra.mxu0 0.0
        %484 = vmatprep.subr.mxu0 0.0
        %485 = vmatpush1.msra.mxu0 0.0
        %486 = vmatprep.subr.mxu0 0.0
        %487 = vmatpush1.msra.mxu0 0.0
        %488 = vmatprep.subr.mxu0 0.0
        %489 = vmatpush1.msra.mxu0 0.0
        %490 = vmatprep.subr.mxu0 0.0
        %491 = vmatpush1.msra.mxu0 0.0
        %492 = vmatprep.subr.mxu0 0.0
        %493 = vmatpush1.msra.mxu0 0.0
        %494 = vmatprep.subr.mxu0 0.0
        %495 = vmatpush1.msra.mxu0 0.0
        %496 = vmatprep.subr.mxu0 0.0
        %497 = vmatpush1.msra.mxu0 0.0
        %498 = vmatprep.subr.mxu0 0.0
        %499 = vmatpush1.msra.mxu0 0.0
        %500 = vmatprep.subr.mxu0 0.0
        %501 = vmatpush1.msra.mxu0 0.0
        %502 = vmatprep.subr.mxu0 0.0
        %503 = vmatpush1.msra.mxu0 0.0
        %504 = vmatprep.subr.mxu0 0.0
        %505 = vmatpush1.msra.mxu0 0.0
        %506 = vmatprep.subr.mxu0 0.0
        %507 = vmatpush1.msra.mxu0 0.0
        %508 = vmatprep.subr.mxu0 0.0
        %509 = vmatpush1.msra.mxu0 0.0
        %510 = vmatprep.subr.mxu0 0.0
        %511 = vmatpush1.msra.mxu0 0.0
        %512 = vmatprep.subr.mxu0 0.0
        %513 = vmatpush1.msra.mxu0 0.0
        %514 = vmatprep.subr.mxu0 0.0
        %515 = vmatpush1.msra.mxu0 0.0
        %516 = vmatprep.subr.mxu0 0.0
        %517 = vmatpush1.msra.mxu0 0.0
        %518 = vmatprep.subr.mxu0 0.0
        %519 = vmatpush1.msra.mxu0 0.0
        %520 = vmatprep.subr.mxu0 0.0
        %521 = vmatpush1.msra.mxu0 0.0
        %522 = vmatprep.subr.mxu0 0.0
        %523 = vmatpush1.msra.mxu0 0.0
        %524 = vmatprep.subr.mxu0 0.0
        %525 = vmatpush1.msra.mxu0 0.0
        %526 = vmatprep.subr.mxu0 0.0
        %527 = vmatpush1.msra.mxu0 0.0
        %528 = vmatprep.subr.mxu0 0.0
        %529 = vmatpush1.msra.mxu0 0.0
        %530 = vmatprep.mubr.f32.mxu0 0.0
        %531 = vmatmul.mubr.f32.gmra.mrb[0].mxu0 %v451
        %v532 = vpop.f32.mrb[0].mxu0
        %v533 = vadd.f32 %v432, %v532
        %v534 = vpop.f32.mrb[0].mxu0
        %535 = vmatprep.mubr.f32.mxu0 0.0
        %536 = vmatmul.mubr.f32.gmra.mrb[0].mxu0 %v454
        %v537 = vpop.f32.mrb[0].mxu0
        %v538 = vadd.f32 %v437, %v537
        %v539 = vpop.f32.mrb[0].mxu0
        %540 = vmatprep.mubr.f32.mxu0 0.0
        %541 = vmatmul.mubr.f32.gmra.mrb[0].mxu0 %v457
        %v542 = vpop.f32.mrb[0].mxu0
        %v543 = vadd.f32 %v442, %v542
        %v544 = vpop.f32.mrb[0].mxu0
        %545 = vmatprep.mubr.f32.mxu0 0.0
        %546 = vmatmul.mubr.f32.gmra.mrb[0].mxu0 %v460
        %v547 = vpop.f32.mrb[0].mxu0
        %v548 = vadd.f32 %v447, %v547
        %v549 = vpop.f32.mrb[0].mxu0
        %550 = vdwg.mxu0
        %555 = vrot.lane.b32.xlu0 %v533, 127
        %v556 = vpop.permute.xlu0 %555
        %557 = vrot.lane.b32.xlu0 %v538, 127
        %v558 = vpop.permute.xlu0 %557
        %559 = vrot.lane.b32.xlu0 %v543, 127
        %v560 = vpop.permute.xlu0 %559
        %561 = vrot.lane.b32.xlu0 %v548, 127
        %v562 = vpop.permute.xlu0 %561
        %v567 = vadd.f32 %v533, %v556
        %v568 = vadd.f32 %v538, %v558
        %v569 = vadd.f32 %v543, %v560
        %v570 = vadd.f32 %v548, %v562
        %v571 = vxor.u32 %v567, 2147483648
        %v572 = vxor.u32 %v568, 2147483648
        %v573 = vxor.u32 %v569, 2147483648
        %v574 = vxor.u32 %v570, 2147483648
        %v575 = vmul.f32 %v571, 1.442695
        %v576 = vpow.pop %v575
        %v577 = vmul.f32 %v572, 1.442695
        %v578 = vpow.pop %v577
        %v579 = vmul.f32 %v573, 1.442695
        %v580 = vpow.pop %v579
        %v581 = vmul.f32 %v574, 1.442695
        %v582 = vpow.pop %v581
        %v583 = vadd.f32 %v576, 1.0
        %v584 = vadd.f32 %v578, 1.0
        %v585 = vadd.f32 %v580, 1.0
        %v586 = vadd.f32 %v582, 1.0
        %v587 = vrcp.pop %v583
        %v588 = vmul.f32 1.0, %v587
        %v589 = vrcp.pop %v584
        %v590 = vmul.f32 1.0, %v589
        %v591 = vrcp.pop %v585
        %v592 = vmul.f32 1.0, %v591
        %v593 = vrcp.pop %v586
        %v594 = vmul.f32 1.0, %v593
        %596 = vset.pattern.permute.xlu0 0
        %597 = vperm.xlu0 %596, %v588
        %v598 = vpop.permute.xlu0 %597
        %601 = vset.pattern.permute.xlu0 0
        %602 = vperm.xlu0 %601, %v590
        %v603 = vpop.permute.xlu0 %602
        %606 = vset.pattern.permute.xlu0 0
        %607 = vperm.xlu0 %606, %v592
        %v608 = vpop.permute.xlu0 %607
        %611 = vset.pattern.permute.xlu0 0
        %612 = vperm.xlu0 %611, %v594
        %v613 = vpop.permute.xlu0 %612
        %v615 = vmul.f32 %v298, %v598
        %v616 = vmul.f32 %v299, %v598
        %v617 = vmul.f32 %v300, %v603
        %v618 = vmul.f32 %v301, %v603
        %v619 = vmul.f32 %v302, %v608
        %v620 = vmul.f32 %v303, %v608
        %v621 = vmul.f32 %v304, %v613
        %v622 = vmul.f32 %v305, %v613
        %623 = vst [vmem:[%s297] sm:$0xff] %v615
        %624 = vst [vmem:[%s297 + $0x8] sm:$0xff] %v616
        %625 = vst [vmem:[%s297 + $0x10] sm:$0xff] %v617
        %626 = vst [vmem:[%s297 + $0x18] sm:$0xff] %v618
        %627 = vst [vmem:[%s297 + $0x20] sm:$0xff] %v619
        %628 = vst [vmem:[%s297 + $0x28] sm:$0xff] %v620
        %629 = vst [vmem:[%s297 + $0x30] sm:$0xff] %v621
        %630 = vst [vmem:[%s297 + $0x38] sm:$0xff] %v622
        %v631 = vmax.f32 %v615, %v619
        %v632 = vmax.f32 %v617, %v621
        %v633 = vmax.f32 %v631, %v632
        %v634 = vrot.slane %v633, 4
        %v635 = vmax.f32 %v633, %v634
        %v636 = vrot.slane %v635, 2
        %v637 = vmax.f32 %v635, %v636
        %v638 = vrot.slane %v637, 1
        %v639 = vmax.f32 %v637, %v638
        %v640 = vmax.f32 %v616, %v620
        %v641 = vmax.f32 %v618, %v622
        %v642 = vmax.f32 %v640, %v641
        %v643 = vrot.slane %v642, 4
        %v644 = vmax.f32 %v642, %v643
        %v645 = vrot.slane %v644, 2
        %v646 = vmax.f32 %v644, %v645
        %v647 = vrot.slane %v646, 1
        %v648 = vmax.f32 %v646, %v647
        %v649 = vadd.f32 %v615, %v617
        %v650 = vadd.f32 %v649, %v619
        %v651 = vadd.f32 %v650, %v621
        %v652 = vrot.slane %v651, 4
        %v653 = vadd.f32 %v651, %v652
        %v654 = vrot.slane %v653, 2
        %v655 = vadd.f32 %v653, %v654
        %v656 = vrot.slane %v655, 1
        %v657 = vadd.f32 %v655, %v656
        %v658 = vadd.f32 %v616, %v618
        %v659 = vadd.f32 %v658, %v620
        %v660 = vadd.f32 %v659, %v622
        %v661 = vrot.slane %v660, 4
        %v662 = vadd.f32 %v660, %v661
        %v663 = vrot.slane %v662, 2
        %v664 = vadd.f32 %v662, %v663
        %v665 = vrot.slane %v664, 1
        %v666 = vadd.f32 %v664, %v665
        %v667 = vrcp.pop 32.0
        %v668 = vmul.f32 %v657, %v667
        %v669 = vmul.f32 %v666, %v667
        %vm670 = vcmask 1040384
        %v671 = vsel %vm670, %v639, %v668
        %v672 = vsel %vm670, %v648, %v669
        %v673 = vlaneseq
        %v674 = vand.u32 %v673, 127
        %v675 = vadd.s32 %v674, 128
        %vm676 = vcmp.lt.s32.totalorder %v674, 0
        %v677 = vsub.s32 0, %v674
        %v678 = vsel %vm676, %v677, %v674
        %v679 = vshrl.u32 %v678, 4
        %v680 = vand.u32 %v678, 15
        %v681 = vsub.s32 0, %v680
        %v682 = vsel %vm676, %v681, %v680
        %vm683 = vcmp.lt.s32.totalorder %v675, 0
        %v684 = vsub.s32 0, %v675
        %v685 = vsel %vm683, %v684, %v675
        %v686 = vshrl.u32 %v685, 4
        %v687 = vand.u32 %v685, 15
        %v688 = vsub.s32 0, %v687
        %v689 = vsel %vm683, %v688, %v687
        %vm690 = vcmp.ne.s32.totalorder %v682, 0
        %vm691 = vcmp.ne.s32.totalorder %v689, 0
        %vm692 = vcmp.lt.s32.totalorder %v682, 0
        %vm693 = vcmp.lt.s32.totalorder %v689, 0
        %vm694 = vmand %vm692, %vm690
        %vm695 = vmand %vm693, %vm691
        %v696 = vadd.s32 %v682, 16
        %v697 = vadd.s32 %v689, 16
        %v698 = vsel %vm694, %v696, %v682
        %v699 = vsel %vm695, %v697, %v689
        %vm700 = vcmp.lt.s32.totalorder %v698, 13
        %vm701 = vcmp.lt.s32.totalorder %v699, 13
        %v702 = vsel %vm700, 1, 0
        %v703 = vsel %vm701, 1, 0
        %vm704 = vcmp.eq.s32.totalorder %v702, 1
        %vm705 = vcmp.eq.s32.totalorder %v703, 1
        %v706 = vsel %vm704, %v671, 0.0
        %v707 = vsel %vm705, %v672, 0.0
        %vm708 = vcmp.lt.s32.totalorder %v698, 14
        %vm709 = vcmp.lt.s32.totalorder %v699, 14
        %v710 = vsel %vm708, 1, 0
        %v711 = vsel %vm709, 1, 0
        %vm712 = vcmp.eq.s32.totalorder %v710, 1
        %vm713 = vcmp.eq.s32.totalorder %v711, 1
        %v714 = vsel %vm712, %v671, 0.0
        %v715 = vsel %vm713, %v672, 0.0
        %vm716 = vcmp.lt.s32.totalorder %v698, 15
        %vm717 = vcmp.lt.s32.totalorder %v699, 15
        %v718 = vsel %vm716, 1, 0
        %v719 = vsel %vm717, 1, 0
        %vm720 = vcmp.eq.s32.totalorder %v718, 1
        %vm721 = vcmp.eq.s32.totalorder %v719, 1
        %v722 = vsel %vm720, %v671, 0.0
        %v723 = vsel %vm721, %v672, 0.0
        %vm724 = vcmp.ge.s32.totalorder %v698, 1
        %vm725 = vcmp.ge.s32.totalorder %v699, 1
        %v726 = vsel %vm724, 1, 0
        %v727 = vsel %vm725, 1, 0
        %vm728 = vcmp.eq.s32.totalorder %v726, 1
        %vm729 = vcmp.eq.s32.totalorder %v727, 1
        %v730 = vsel %vm728, %v671, 0.0
        %v731 = vsel %vm729, %v672, 0.0
        %vm732 = vcmp.ge.s32.totalorder %v698, 2
        %vm733 = vcmp.ge.s32.totalorder %v699, 2
        %v734 = vsel %vm732, 1, 0
        %v735 = vsel %vm733, 1, 0
        %vm736 = vcmp.eq.s32.totalorder %v734, 1
        %vm737 = vcmp.eq.s32.totalorder %v735, 1
        %v738 = vsel %vm736, %v671, 0.0
        %v739 = vsel %vm737, %v672, 0.0
        %vm740 = vcmp.ge.s32.totalorder %v698, 3
        %vm741 = vcmp.ge.s32.totalorder %v699, 3
        %v742 = vsel %vm740, 1, 0
        %v743 = vsel %vm741, 1, 0
        %vm744 = vcmp.eq.s32.totalorder %v742, 1
        %vm745 = vcmp.eq.s32.totalorder %v743, 1
        %v746 = vsel %vm744, %v671, 0.0
        %v747 = vsel %vm745, %v672, 0.0
        %v748 = vld [vmem:[%s5] sm:$0x3]
        %751 = vrot.lane.b32.xlu0 %v706, 51
        %v752 = vpop.permute.xlu0 %751
        %753 = vrot.lane.b32.xlu0 %v707, 51
        %v754 = vpop.permute.xlu0 %753
        %vm755 = vcmask 416768
        %v756 = vsel %vm755, %v752, %v754
        %v759 = vsel %vm755, 0.0, %v752
        %761 = vset.pattern.permute.xlu0 0
        %762 = vperm.xlu0 %761, %v748
        %v763 = vpop.permute.xlu0 %762
        %v765 = vmul.f32 %v763, %v759
        %v766 = vmul.f32 %v763, %v756
        %v767 = vadd.f32 %v765, 0.0
        %v768 = vadd.f32 %v766, 0.0
        %771 = vrot.lane.b32.xlu0 %v714, 50
        %v772 = vpop.permute.xlu0 %771
        %773 = vrot.lane.b32.xlu0 %v715, 50
        %v774 = vpop.permute.xlu0 %773
        %vm775 = vcmask 408576
        %v776 = vsel %vm775, %v772, %v774
        %v779 = vsel %vm775, 0.0, %v772
        %780 = vset.pattern.permute.xlu0 1
        %781 = vperm.xlu0 %780, %v748
        %v782 = vpop.permute.xlu0 %781
        %v784 = vmul.f32 %v782, %v779
        %v785 = vmul.f32 %v782, %v776
        %v786 = vadd.f32 %v767, %v784
        %v787 = vadd.f32 %v768, %v785
        %790 = vrot.lane.b32.xlu0 %v722, 49
        %v791 = vpop.permute.xlu0 %790
        %792 = vrot.lane.b32.xlu0 %v723, 49
        %v793 = vpop.permute.xlu0 %792
        %vm794 = vcmask 400384
        %v795 = vsel %vm794, %v791, %v793
        %v798 = vsel %vm794, 0.0, %v791
        %799 = vset.pattern.permute.xlu0 2
        %800 = vperm.xlu0 %799, %v748
        %v801 = vpop.permute.xlu0 %800
        %v803 = vmul.f32 %v801, %v798
        %v804 = vmul.f32 %v801, %v795
        %v805 = vadd.f32 %v786, %v803
        %v806 = vadd.f32 %v787, %v804
        %809 = vrot.lane.b32.xlu0 %v671, 48
        %v810 = vpop.permute.xlu0 %809
        %811 = vrot.lane.b32.xlu0 %v672, 48
        %v812 = vpop.permute.xlu0 %811
        %vm813 = vcmask 392192
        %v814 = vsel %vm813, %v810, %v812
        %v817 = vsel %vm813, 0.0, %v810
        %818 = vset.pattern.permute.xlu0 3
        %819 = vperm.xlu0 %818, %v748
        %v820 = vpop.permute.xlu0 %819
        %v822 = vmul.f32 %v820, %v817
        %v823 = vmul.f32 %v820, %v814
        %v824 = vadd.f32 %v805, %v822
        %v825 = vadd.f32 %v806, %v823
        %828 = vrot.lane.b32.xlu0 %v730, 47
        %v829 = vpop.permute.xlu0 %828
        %830 = vrot.lane.b32.xlu0 %v731, 47
        %v831 = vpop.permute.xlu0 %830
        %vm832 = vcmask 384000
        %v833 = vsel %vm832, %v829, %v831
        %v836 = vsel %vm832, 0.0, %v829
        %837 = vset.pattern.permute.xlu0 4
        %838 = vperm.xlu0 %837, %v748
        %v839 = vpop.permute.xlu0 %838
        %v841 = vmul.f32 %v839, %v836
        %v842 = vmul.f32 %v839, %v833
        %v843 = vadd.f32 %v824, %v841
        %v844 = vadd.f32 %v825, %v842
        %847 = vrot.lane.b32.xlu0 %v738, 46
        %v848 = vpop.permute.xlu0 %847
        %849 = vrot.lane.b32.xlu0 %v739, 46
        %v850 = vpop.permute.xlu0 %849
        %vm851 = vcmask 375808
        %v852 = vsel %vm851, %v848, %v850
        %v855 = vsel %vm851, 0.0, %v848
        %856 = vset.pattern.permute.xlu0 5
        %857 = vperm.xlu0 %856, %v748
        %v858 = vpop.permute.xlu0 %857
        %v860 = vmul.f32 %v858, %v855
        %v861 = vmul.f32 %v858, %v852
        %v862 = vadd.f32 %v843, %v860
        %v863 = vadd.f32 %v844, %v861
        %866 = vrot.lane.b32.xlu0 %v746, 45
        %v867 = vpop.permute.xlu0 %866
        %868 = vrot.lane.b32.xlu0 %v747, 45
        %v869 = vpop.permute.xlu0 %868
        %vm870 = vcmask 367616
        %v871 = vsel %vm870, %v867, %v869
        %v874 = vsel %vm870, 0.0, %v867
        %875 = vset.pattern.permute.xlu0 6
        %876 = vperm.xlu0 %875, %v748
        %v877 = vpop.permute.xlu0 %876
        %v879 = vmul.f32 %v877, %v874
        %v880 = vmul.f32 %v877, %v871
        %v881 = vadd.f32 %v862, %v879
        %v882 = vadd.f32 %v863, %v880
        %883 = vrot.lane.b32.xlu0 %v706, 35
        %v884 = vpop.permute.xlu0 %883
        %885 = vrot.lane.b32.xlu0 %v707, 35
        %v886 = vpop.permute.xlu0 %885
        %vm887 = vcmask 285696
        %v888 = vsel %vm887, %v884, %v886
        %v891 = vsel %vm887, 0.0, %v884
        %892 = vset.pattern.permute.xlu0 7
        %893 = vperm.xlu0 %892, %v748
        %v894 = vpop.permute.xlu0 %893
        %v896 = vmul.f32 %v894, %v891
        %v897 = vmul.f32 %v894, %v888
        %v898 = vadd.f32 %v881, %v896
        %v899 = vadd.f32 %v882, %v897
        %900 = vrot.lane.b32.xlu0 %v714, 34
        %v901 = vpop.permute.xlu0 %900
        %902 = vrot.lane.b32.xlu0 %v715, 34
        %v903 = vpop.permute.xlu0 %902
        %vm904 = vcmask 277504
        %v905 = vsel %vm904, %v901, %v903
        %v908 = vsel %vm904, 0.0, %v901
        %909 = vset.pattern.permute.xlu0 8
        %910 = vperm.xlu0 %909, %v748
        %v911 = vpop.permute.xlu0 %910
        %v913 = vmul.f32 %v911, %v908
        %v914 = vmul.f32 %v911, %v905
        %v915 = vadd.f32 %v898, %v913
        %v916 = vadd.f32 %v899, %v914
        %917 = vrot.lane.b32.xlu0 %v722, 33
        %v918 = vpop.permute.xlu0 %917
        %919 = vrot.lane.b32.xlu0 %v723, 33
        %v920 = vpop.permute.xlu0 %919
        %vm921 = vcmask 269312
        %v922 = vsel %vm921, %v918, %v920
        %v925 = vsel %vm921, 0.0, %v918
        %926 = vset.pattern.permute.xlu0 9
        %927 = vperm.xlu0 %926, %v748
        %v928 = vpop.permute.xlu0 %927
        %v930 = vmul.f32 %v928, %v925
        %v931 = vmul.f32 %v928, %v922
        %v932 = vadd.f32 %v915, %v930
        %v933 = vadd.f32 %v916, %v931
        %934 = vrot.lane.b32.xlu0 %v671, 32
        %v935 = vpop.permute.xlu0 %934
        %936 = vrot.lane.b32.xlu0 %v672, 32
        %v937 = vpop.permute.xlu0 %936
        %v938 = vsel %vm346, %v935, %v937
        %v941 = vsel %vm346, 0.0, %v935
        %942 = vset.pattern.permute.xlu0 10
        %943 = vperm.xlu0 %942, %v748
        %v944 = vpop.permute.xlu0 %943
        %v946 = vmul.f32 %v944, %v941
        %v947 = vmul.f32 %v944, %v938
        %v948 = vadd.f32 %v932, %v946
        %v949 = vadd.f32 %v933, %v947
        %950 = vrot.lane.b32.xlu0 %v730, 31
        %v951 = vpop.permute.xlu0 %950
        %952 = vrot.lane.b32.xlu0 %v731, 31
        %v953 = vpop.permute.xlu0 %952
        %vm954 = vcmask 252928
        %v955 = vsel %vm954, %v951, %v953
        %v958 = vsel %vm954, 0.0, %v951
        %959 = vset.pattern.permute.xlu0 11
        %960 = vperm.xlu0 %959, %v748
        %v961 = vpop.permute.xlu0 %960
        %v963 = vmul.f32 %v961, %v958
        %v964 = vmul.f32 %v961, %v955
        %v965 = vadd.f32 %v948, %v963
        %v966 = vadd.f32 %v949, %v964
        %967 = vrot.lane.b32.xlu0 %v738, 30
        %v968 = vpop.permute.xlu0 %967
        %969 = vrot.lane.b32.xlu0 %v739, 30
        %v970 = vpop.permute.xlu0 %969
        %vm971 = vcmask 244736
        %v972 = vsel %vm971, %v968, %v970
        %v975 = vsel %vm971, 0.0, %v968
        %976 = vset.pattern.permute.xlu0 12
        %977 = vperm.xlu0 %976, %v748
        %v978 = vpop.permute.xlu0 %977
        %v980 = vmul.f32 %v978, %v975
        %v981 = vmul.f32 %v978, %v972
        %v982 = vadd.f32 %v965, %v980
        %v983 = vadd.f32 %v966, %v981
        %984 = vrot.lane.b32.xlu0 %v746, 29
        %v985 = vpop.permute.xlu0 %984
        %986 = vrot.lane.b32.xlu0 %v747, 29
        %v987 = vpop.permute.xlu0 %986
        %vm988 = vcmask 236544
        %v989 = vsel %vm988, %v985, %v987
        %v992 = vsel %vm988, 0.0, %v985
        %993 = vset.pattern.permute.xlu0 13
        %994 = vperm.xlu0 %993, %v748
        %v995 = vpop.permute.xlu0 %994
        %v997 = vmul.f32 %v995, %v992
        %v998 = vmul.f32 %v995, %v989
        %v999 = vadd.f32 %v982, %v997
        %v1000 = vadd.f32 %v983, %v998
        %1001 = vrot.lane.b32.xlu0 %v706, 19
        %v1002 = vpop.permute.xlu0 %1001
        %1003 = vrot.lane.b32.xlu0 %v707, 19
        %v1004 = vpop.permute.xlu0 %1003
        %vm1005 = vcmask 154624
        %v1006 = vsel %vm1005, %v1002, %v1004
        %v1009 = vsel %vm1005, 0.0, %v1002
        %1010 = vset.pattern.permute.xlu0 14
        %1011 = vperm.xlu0 %1010, %v748
        %v1012 = vpop.permute.xlu0 %1011
        %v1014 = vmul.f32 %v1012, %v1009
        %v1015 = vmul.f32 %v1012, %v1006
        %v1016 = vadd.f32 %v999, %v1014
        %v1017 = vadd.f32 %v1000, %v1015
        %1018 = vrot.lane.b32.xlu0 %v714, 18
        %v1019 = vpop.permute.xlu0 %1018
        %1020 = vrot.lane.b32.xlu0 %v715, 18
        %v1021 = vpop.permute.xlu0 %1020
        %vm1022 = vcmask 146432
        %v1023 = vsel %vm1022, %v1019, %v1021
        %v1026 = vsel %vm1022, 0.0, %v1019
        %1027 = vset.pattern.permute.xlu0 15
        %1028 = vperm.xlu0 %1027, %v748
        %v1029 = vpop.permute.xlu0 %1028
        %v1031 = vmul.f32 %v1029, %v1026
        %v1032 = vmul.f32 %v1029, %v1023
        %v1033 = vadd.f32 %v1016, %v1031
        %v1034 = vadd.f32 %v1017, %v1032
        %1035 = vrot.lane.b32.xlu0 %v722, 17
        %v1036 = vpop.permute.xlu0 %1035
        %1037 = vrot.lane.b32.xlu0 %v723, 17
        %v1038 = vpop.permute.xlu0 %1037
        %vm1039 = vcmask 138240
        %v1040 = vsel %vm1039, %v1036, %v1038
        %v1043 = vsel %vm1039, 0.0, %v1036
        %1044 = vset.pattern.permute.xlu0 16
        %1045 = vperm.xlu0 %1044, %v748
        %v1046 = vpop.permute.xlu0 %1045
        %v1048 = vmul.f32 %v1046, %v1043
        %v1049 = vmul.f32 %v1046, %v1040
        %v1050 = vadd.f32 %v1033, %v1048
        %v1051 = vadd.f32 %v1034, %v1049
        %1052 = vrot.lane.b32.xlu0 %v671, 16
        %v1053 = vpop.permute.xlu0 %1052
        %1054 = vrot.lane.b32.xlu0 %v672, 16
        %v1055 = vpop.permute.xlu0 %1054
        %vm1056 = vcmask 130048
        %v1057 = vsel %vm1056, %v1053, %v1055
        %v1060 = vsel %vm1056, 0.0, %v1053
        %1061 = vset.pattern.permute.xlu0 17
        %1062 = vperm.xlu0 %1061, %v748
        %v1063 = vpop.permute.xlu0 %1062
        %v1065 = vmul.f32 %v1063, %v1060
        %v1066 = vmul.f32 %v1063, %v1057
        %v1067 = vadd.f32 %v1050, %v1065
        %v1068 = vadd.f32 %v1051, %v1066
        %1069 = vrot.lane.b32.xlu0 %v730, 15
        %v1070 = vpop.permute.xlu0 %1069
        %1071 = vrot.lane.b32.xlu0 %v731, 15
        %v1072 = vpop.permute.xlu0 %1071
        %vm1073 = vcmask 121856
        %v1074 = vsel %vm1073, %v1070, %v1072
        %v1077 = vsel %vm1073, 0.0, %v1070
        %1078 = vset.pattern.permute.xlu0 18
        %1079 = vperm.xlu0 %1078, %v748
        %v1080 = vpop.permute.xlu0 %1079
        %v1082 = vmul.f32 %v1080, %v1077
        %v1083 = vmul.f32 %v1080, %v1074
        %v1084 = vadd.f32 %v1067, %v1082
        %v1085 = vadd.f32 %v1068, %v1083
        %1086 = vrot.lane.b32.xlu0 %v738, 14
        %v1087 = vpop.permute.xlu0 %1086
        %1088 = vrot.lane.b32.xlu0 %v739, 14
        %v1089 = vpop.permute.xlu0 %1088
        %vm1090 = vcmask 113664
        %v1091 = vsel %vm1090, %v1087, %v1089
        %v1094 = vsel %vm1090, 0.0, %v1087
        %1095 = vset.pattern.permute.xlu0 19
        %1096 = vperm.xlu0 %1095, %v748
        %v1097 = vpop.permute.xlu0 %1096
        %v1099 = vmul.f32 %v1097, %v1094
        %v1100 = vmul.f32 %v1097, %v1091
        %v1101 = vadd.f32 %v1084, %v1099
        %v1102 = vadd.f32 %v1085, %v1100
        %1103 = vrot.lane.b32.xlu0 %v746, 13
        %v1104 = vpop.permute.xlu0 %1103
        %1105 = vrot.lane.b32.xlu0 %v747, 13
        %v1106 = vpop.permute.xlu0 %1105
        %vm1107 = vcmask 105472
        %v1108 = vsel %vm1107, %v1104, %v1106
        %v1111 = vsel %vm1107, 0.0, %v1104
        %1112 = vset.pattern.permute.xlu0 20
        %1113 = vperm.xlu0 %1112, %v748
        %v1114 = vpop.permute.xlu0 %1113
        %v1116 = vmul.f32 %v1114, %v1111
        %v1117 = vmul.f32 %v1114, %v1108
        %v1118 = vadd.f32 %v1101, %v1116
        %v1119 = vadd.f32 %v1102, %v1117
        %1120 = vrot.lane.b32.xlu0 %v706, 3
        %v1121 = vpop.permute.xlu0 %1120
        %1122 = vrot.lane.b32.xlu0 %v707, 3
        %v1123 = vpop.permute.xlu0 %1122
        %vm1124 = vcmask 23552
        %v1125 = vsel %vm1124, %v1121, %v1123
        %v1128 = vsel %vm1124, 0.0, %v1121
        %1129 = vset.pattern.permute.xlu0 21
        %1130 = vperm.xlu0 %1129, %v748
        %v1131 = vpop.permute.xlu0 %1130
        %v1133 = vmul.f32 %v1131, %v1128
        %v1134 = vmul.f32 %v1131, %v1125
        %v1135 = vadd.f32 %v1118, %v1133
        %v1136 = vadd.f32 %v1119, %v1134
        %1137 = vrot.lane.b32.xlu0 %v714, 2
        %v1138 = vpop.permute.xlu0 %1137
        %1139 = vrot.lane.b32.xlu0 %v715, 2
        %v1140 = vpop.permute.xlu0 %1139
        %vm1141 = vcmask 15360
        %v1142 = vsel %vm1141, %v1138, %v1140
        %v1145 = vsel %vm1141, 0.0, %v1138
        %1146 = vset.pattern.permute.xlu0 22
        %1147 = vperm.xlu0 %1146, %v748
        %v1148 = vpop.permute.xlu0 %1147
        %v1150 = vmul.f32 %v1148, %v1145
        %v1151 = vmul.f32 %v1148, %v1142
        %v1152 = vadd.f32 %v1135, %v1150
        %v1153 = vadd.f32 %v1136, %v1151
        %1154 = vrot.lane.b32.xlu0 %v722, 1
        %v1155 = vpop.permute.xlu0 %1154
        %1156 = vrot.lane.b32.xlu0 %v723, 1
        %v1157 = vpop.permute.xlu0 %1156
        %v1158 = vsel %vm334, %v1155, %v1157
        %v1161 = vsel %vm334, 0.0, %v1155
        %1162 = vset.pattern.permute.xlu0 23
        %1163 = vperm.xlu0 %1162, %v748
        %v1164 = vpop.permute.xlu0 %1163
        %v1166 = vmul.f32 %v1164, %v1161
        %v1167 = vmul.f32 %v1164, %v1158
        %v1168 = vadd.f32 %v1152, %v1166
        %v1169 = vadd.f32 %v1153, %v1167
        %1170 = vset.pattern.permute.xlu0 24
        %1171 = vperm.xlu0 %1170, %v748
        %v1172 = vpop.permute.xlu0 %1171
        %v1174 = vmul.f32 %v1172, %v671
        %v1175 = vmul.f32 %v1172, %v672
        %v1176 = vadd.f32 %v1168, %v1174
        %v1177 = vadd.f32 %v1169, %v1175
        %1178 = vrot.lane.b32.xlu0 %v730, 127
        %v1179 = vpop.permute.xlu0 %1178
        %1180 = vrot.lane.b32.xlu0 %v731, 127
        %v1181 = vpop.permute.xlu0 %1180
        %vm1182 = vcmask 1039360
        %v1183 = vsel %vm1182, %v1179, %v1181
        %v1186 = vsel %vm1182, %v1181, 0.0
        %1187 = vset.pattern.permute.xlu0 25
        %1188 = vperm.xlu0 %1187, %v748
        %v1189 = vpop.permute.xlu0 %1188
        %v1191 = vmul.f32 %v1189, %v1183
        %v1192 = vmul.f32 %v1189, %v1186
        %v1193 = vadd.f32 %v1176, %v1191
        %v1194 = vadd.f32 %v1177, %v1192
        %1195 = vrot.lane.b32.xlu0 %v738, 126
        %v1196 = vpop.permute.xlu0 %1195
        %1197 = vrot.lane.b32.xlu0 %v739, 126
        %v1198 = vpop.permute.xlu0 %1197
        %vm1199 = vcmask 1031168
        %v1200 = vsel %vm1199, %v1196, %v1198
        %v1203 = vsel %vm1199, %v1198, 0.0
        %1204 = vset.pattern.permute.xlu0 26
        %1205 = vperm.xlu0 %1204, %v748
        %v1206 = vpop.permute.xlu0 %1205
        %v1208 = vmul.f32 %v1206, %v1200
        %v1209 = vmul.f32 %v1206, %v1203
        %v1210 = vadd.f32 %v1193, %v1208
        %v1211 = vadd.f32 %v1194, %v1209
        %1212 = vrot.lane.b32.xlu0 %v746, 125
        %v1213 = vpop.permute.xlu0 %1212
        %1214 = vrot.lane.b32.xlu0 %v747, 125
        %v1215 = vpop.permute.xlu0 %1214
        %vm1216 = vcmask 1022976
        %v1217 = vsel %vm1216, %v1213, %v1215
        %v1220 = vsel %vm1216, %v1215, 0.0
        %1221 = vset.pattern.permute.xlu0 27
        %1222 = vperm.xlu0 %1221, %v748
        %v1223 = vpop.permute.xlu0 %1222
        %v1225 = vmul.f32 %v1223, %v1217
        %v1226 = vmul.f32 %v1223, %v1220
        %v1227 = vadd.f32 %v1210, %v1225
        %v1228 = vadd.f32 %v1211, %v1226
        %1229 = vrot.lane.b32.xlu0 %v706, 115
        %v1230 = vpop.permute.xlu0 %1229
        %1231 = vrot.lane.b32.xlu0 %v707, 115
        %v1232 = vpop.permute.xlu0 %1231
        %vm1233 = vcmask 941056
        %v1234 = vsel %vm1233, %v1230, %v1232
        %v1237 = vsel %vm1233, %v1232, 0.0
        %1238 = vset.pattern.permute.xlu0 28
        %1239 = vperm.xlu0 %1238, %v748
        %v1240 = vpop.permute.xlu0 %1239
        %v1242 = vmul.f32 %v1240, %v1234
        %v1243 = vmul.f32 %v1240, %v1237
        %v1244 = vadd.f32 %v1227, %v1242
        %v1245 = vadd.f32 %v1228, %v1243
        %1246 = vrot.lane.b32.xlu0 %v714, 114
        %v1247 = vpop.permute.xlu0 %1246
        %1248 = vrot.lane.b32.xlu0 %v715, 114
        %v1249 = vpop.permute.xlu0 %1248
        %vm1250 = vcmask 932864
        %v1251 = vsel %vm1250, %v1247, %v1249
        %v1254 = vsel %vm1250, %v1249, 0.0
        %1255 = vset.pattern.permute.xlu0 29
        %1256 = vperm.xlu0 %1255, %v748
        %v1257 = vpop.permute.xlu0 %1256
        %v1259 = vmul.f32 %v1257, %v1251
        %v1260 = vmul.f32 %v1257, %v1254
        %v1261 = vadd.f32 %v1244, %v1259
        %v1262 = vadd.f32 %v1245, %v1260
        %1263 = vrot.lane.b32.xlu0 %v722, 113
        %v1264 = vpop.permute.xlu0 %1263
        %1265 = vrot.lane.b32.xlu0 %v723, 113
        %v1266 = vpop.permute.xlu0 %1265
        %vm1267 = vcmask 924672
        %v1268 = vsel %vm1267, %v1264, %v1266
        %v1271 = vsel %vm1267, %v1266, 0.0
        %1272 = vset.pattern.permute.xlu0 30
        %1273 = vperm.xlu0 %1272, %v748
        %v1274 = vpop.permute.xlu0 %1273
        %v1276 = vmul.f32 %v1274, %v1268
        %v1277 = vmul.f32 %v1274, %v1271
        %v1278 = vadd.f32 %v1261, %v1276
        %v1279 = vadd.f32 %v1262, %v1277
        %1280 = vrot.lane.b32.xlu0 %v671, 112
        %v1281 = vpop.permute.xlu0 %1280
        %1282 = vrot.lane.b32.xlu0 %v672, 112
        %v1283 = vpop.permute.xlu0 %1282
        %vm1284 = vcmask 916480
        %v1285 = vsel %vm1284, %v1281, %v1283
        %v1288 = vsel %vm1284, %v1283, 0.0
        %1289 = vset.pattern.permute.xlu0 31
        %1290 = vperm.xlu0 %1289, %v748
        %v1291 = vpop.permute.xlu0 %1290
        %v1293 = vmul.f32 %v1291, %v1285
        %v1294 = vmul.f32 %v1291, %v1288
        %v1295 = vadd.f32 %v1278, %v1293
        %v1296 = vadd.f32 %v1279, %v1294
        %1297 = vrot.lane.b32.xlu0 %v730, 111
        %v1298 = vpop.permute.xlu0 %1297
        %1299 = vrot.lane.b32.xlu0 %v731, 111
        %v1300 = vpop.permute.xlu0 %1299
        %vm1301 = vcmask 908288
        %v1302 = vsel %vm1301, %v1298, %v1300
        %v1305 = vsel %vm1301, %v1300, 0.0
        %1306 = vset.pattern.permute.xlu0 32
        %1307 = vperm.xlu0 %1306, %v748
        %v1308 = vpop.permute.xlu0 %1307
        %v1310 = vmul.f32 %v1308, %v1302
        %v1311 = vmul.f32 %v1308, %v1305
        %v1312 = vadd.f32 %v1295, %v1310
        %v1313 = vadd.f32 %v1296, %v1311
        %1314 = vrot.lane.b32.xlu0 %v738, 110
        %v1315 = vpop.permute.xlu0 %1314
        %1316 = vrot.lane.b32.xlu0 %v739, 110
        %v1317 = vpop.permute.xlu0 %1316
        %vm1318 = vcmask 900096
        %v1319 = vsel %vm1318, %v1315, %v1317
        %v1322 = vsel %vm1318, %v1317, 0.0
        %1323 = vset.pattern.permute.xlu0 33
        %1324 = vperm.xlu0 %1323, %v748
        %v1325 = vpop.permute.xlu0 %1324
        %v1327 = vmul.f32 %v1325, %v1319
        %v1328 = vmul.f32 %v1325, %v1322
        %v1329 = vadd.f32 %v1312, %v1327
        %v1330 = vadd.f32 %v1313, %v1328
        %1331 = vrot.lane.b32.xlu0 %v746, 109
        %v1332 = vpop.permute.xlu0 %1331
        %1333 = vrot.lane.b32.xlu0 %v747, 109
        %v1334 = vpop.permute.xlu0 %1333
        %vm1335 = vcmask 891904
        %v1336 = vsel %vm1335, %v1332, %v1334
        %v1339 = vsel %vm1335, %v1334, 0.0
        %1340 = vset.pattern.permute.xlu0 34
        %1341 = vperm.xlu0 %1340, %v748
        %v1342 = vpop.permute.xlu0 %1341
        %v1344 = vmul.f32 %v1342, %v1336
        %v1345 = vmul.f32 %v1342, %v1339
        %v1346 = vadd.f32 %v1329, %v1344
        %v1347 = vadd.f32 %v1330, %v1345
        %1348 = vrot.lane.b32.xlu0 %v706, 99
        %v1349 = vpop.permute.xlu0 %1348
        %1350 = vrot.lane.b32.xlu0 %v707, 99
        %v1351 = vpop.permute.xlu0 %1350
        %vm1352 = vcmask 809984
        %v1353 = vsel %vm1352, %v1349, %v1351
        %v1356 = vsel %vm1352, %v1351, 0.0
        %1357 = vset.pattern.permute.xlu0 35
        %1358 = vperm.xlu0 %1357, %v748
        %v1359 = vpop.permute.xlu0 %1358
        %v1361 = vmul.f32 %v1359, %v1353
        %v1362 = vmul.f32 %v1359, %v1356
        %v1363 = vadd.f32 %v1346, %v1361
        %v1364 = vadd.f32 %v1347, %v1362
        %1365 = vrot.lane.b32.xlu0 %v714, 98
        %v1366 = vpop.permute.xlu0 %1365
        %1367 = vrot.lane.b32.xlu0 %v715, 98
        %v1368 = vpop.permute.xlu0 %1367
        %vm1369 = vcmask 801792
        %v1370 = vsel %vm1369, %v1366, %v1368
        %v1373 = vsel %vm1369, %v1368, 0.0
        %1374 = vset.pattern.permute.xlu0 36
        %1375 = vperm.xlu0 %1374, %v748
        %v1376 = vpop.permute.xlu0 %1375
        %v1378 = vmul.f32 %v1376, %v1370
        %v1379 = vmul.f32 %v1376, %v1373
        %v1380 = vadd.f32 %v1363, %v1378
        %v1381 = vadd.f32 %v1364, %v1379
        %1382 = vrot.lane.b32.xlu0 %v722, 97
        %v1383 = vpop.permute.xlu0 %1382
        %1384 = vrot.lane.b32.xlu0 %v723, 97
        %v1385 = vpop.permute.xlu0 %1384
        %vm1386 = vcmask 793600
        %v1387 = vsel %vm1386, %v1383, %v1385
        %v1390 = vsel %vm1386, %v1385, 0.0
        %1391 = vset.pattern.permute.xlu0 37
        %1392 = vperm.xlu0 %1391, %v748
        %v1393 = vpop.permute.xlu0 %1392
        %v1395 = vmul.f32 %v1393, %v1387
        %v1396 = vmul.f32 %v1393, %v1390
        %v1397 = vadd.f32 %v1380, %v1395
        %v1398 = vadd.f32 %v1381, %v1396
        %1399 = vrot.lane.b32.xlu0 %v671, 96
        %v1400 = vpop.permute.xlu0 %1399
        %1401 = vrot.lane.b32.xlu0 %v672, 96
        %v1402 = vpop.permute.xlu0 %1401
        %vm1403 = vcmask 785408
        %v1404 = vsel %vm1403, %v1400, %v1402
        %v1407 = vsel %vm1403, %v1402, 0.0
        %1408 = vset.pattern.permute.xlu0 38
        %1409 = vperm.xlu0 %1408, %v748
        %v1410 = vpop.permute.xlu0 %1409
        %v1412 = vmul.f32 %v1410, %v1404
        %v1413 = vmul.f32 %v1410, %v1407
        %v1414 = vadd.f32 %v1397, %v1412
        %v1415 = vadd.f32 %v1398, %v1413
        %1416 = vrot.lane.b32.xlu0 %v730, 95
        %v1417 = vpop.permute.xlu0 %1416
        %1418 = vrot.lane.b32.xlu0 %v731, 95
        %v1419 = vpop.permute.xlu0 %1418
        %vm1420 = vcmask 777216
        %v1421 = vsel %vm1420, %v1417, %v1419
        %v1424 = vsel %vm1420, %v1419, 0.0
        %1425 = vset.pattern.permute.xlu0 39
        %1426 = vperm.xlu0 %1425, %v748
        %v1427 = vpop.permute.xlu0 %1426
        %v1429 = vmul.f32 %v1427, %v1421
        %v1430 = vmul.f32 %v1427, %v1424
        %v1431 = vadd.f32 %v1414, %v1429
        %v1432 = vadd.f32 %v1415, %v1430
        %1433 = vrot.lane.b32.xlu0 %v738, 94
        %v1434 = vpop.permute.xlu0 %1433
        %1435 = vrot.lane.b32.xlu0 %v739, 94
        %v1436 = vpop.permute.xlu0 %1435
        %vm1437 = vcmask 769024
        %v1438 = vsel %vm1437, %v1434, %v1436
        %v1441 = vsel %vm1437, %v1436, 0.0
        %1442 = vset.pattern.permute.xlu0 40
        %1443 = vperm.xlu0 %1442, %v748
        %v1444 = vpop.permute.xlu0 %1443
        %v1446 = vmul.f32 %v1444, %v1438
        %v1447 = vmul.f32 %v1444, %v1441
        %v1448 = vadd.f32 %v1431, %v1446
        %v1449 = vadd.f32 %v1432, %v1447
        %1450 = vrot.lane.b32.xlu0 %v746, 93
        %v1451 = vpop.permute.xlu0 %1450
        %1452 = vrot.lane.b32.xlu0 %v747, 93
        %v1453 = vpop.permute.xlu0 %1452
        %vm1454 = vcmask 760832
        %v1455 = vsel %vm1454, %v1451, %v1453
        %v1458 = vsel %vm1454, %v1453, 0.0
        %1459 = vset.pattern.permute.xlu0 41
        %1460 = vperm.xlu0 %1459, %v748
        %v1461 = vpop.permute.xlu0 %1460
        %v1463 = vmul.f32 %v1461, %v1455
        %v1464 = vmul.f32 %v1461, %v1458
        %v1465 = vadd.f32 %v1448, %v1463
        %v1466 = vadd.f32 %v1449, %v1464
        %1467 = vrot.lane.b32.xlu0 %v706, 83
        %v1468 = vpop.permute.xlu0 %1467
        %1469 = vrot.lane.b32.xlu0 %v707, 83
        %v1470 = vpop.permute.xlu0 %1469
        %vm1471 = vcmask 678912
        %v1472 = vsel %vm1471, %v1468, %v1470
        %v1475 = vsel %vm1471, %v1470, 0.0
        %1476 = vset.pattern.permute.xlu0 42
        %1477 = vperm.xlu0 %1476, %v748
        %v1478 = vpop.permute.xlu0 %1477
        %v1480 = vmul.f32 %v1478, %v1472
        %v1481 = vmul.f32 %v1478, %v1475
        %v1482 = vadd.f32 %v1465, %v1480
        %v1483 = vadd.f32 %v1466, %v1481
        %1484 = vrot.lane.b32.xlu0 %v714, 82
        %v1485 = vpop.permute.xlu0 %1484
        %1486 = vrot.lane.b32.xlu0 %v715, 82
        %v1487 = vpop.permute.xlu0 %1486
        %vm1488 = vcmask 670720
        %v1489 = vsel %vm1488, %v1485, %v1487
        %v1492 = vsel %vm1488, %v1487, 0.0
        %1493 = vset.pattern.permute.xlu0 43
        %1494 = vperm.xlu0 %1493, %v748
        %v1495 = vpop.permute.xlu0 %1494
        %v1497 = vmul.f32 %v1495, %v1489
        %v1498 = vmul.f32 %v1495, %v1492
        %v1499 = vadd.f32 %v1482, %v1497
        %v1500 = vadd.f32 %v1483, %v1498
        %1501 = vrot.lane.b32.xlu0 %v722, 81
        %v1502 = vpop.permute.xlu0 %1501
        %1503 = vrot.lane.b32.xlu0 %v723, 81
        %v1504 = vpop.permute.xlu0 %1503
        %vm1505 = vcmask 662528
        %v1506 = vsel %vm1505, %v1502, %v1504
        %v1509 = vsel %vm1505, %v1504, 0.0
        %1510 = vset.pattern.permute.xlu0 44
        %1511 = vperm.xlu0 %1510, %v748
        %v1512 = vpop.permute.xlu0 %1511
        %v1514 = vmul.f32 %v1512, %v1506
        %v1515 = vmul.f32 %v1512, %v1509
        %v1516 = vadd.f32 %v1499, %v1514
        %v1517 = vadd.f32 %v1500, %v1515
        %1518 = vrot.lane.b32.xlu0 %v671, 80
        %v1519 = vpop.permute.xlu0 %1518
        %1520 = vrot.lane.b32.xlu0 %v672, 80
        %v1521 = vpop.permute.xlu0 %1520
        %vm1522 = vcmask 654336
        %v1523 = vsel %vm1522, %v1519, %v1521
        %v1526 = vsel %vm1522, %v1521, 0.0
        %1527 = vset.pattern.permute.xlu0 45
        %1528 = vperm.xlu0 %1527, %v748
        %v1529 = vpop.permute.xlu0 %1528
        %v1531 = vmul.f32 %v1529, %v1523
        %v1532 = vmul.f32 %v1529, %v1526
        %v1533 = vadd.f32 %v1516, %v1531
        %v1534 = vadd.f32 %v1517, %v1532
        %1535 = vrot.lane.b32.xlu0 %v730, 79
        %v1536 = vpop.permute.xlu0 %1535
        %1537 = vrot.lane.b32.xlu0 %v731, 79
        %v1538 = vpop.permute.xlu0 %1537
        %vm1539 = vcmask 646144
        %v1540 = vsel %vm1539, %v1536, %v1538
        %v1543 = vsel %vm1539, %v1538, 0.0
        %1544 = vset.pattern.permute.xlu0 46
        %1545 = vperm.xlu0 %1544, %v748
        %v1546 = vpop.permute.xlu0 %1545
        %v1548 = vmul.f32 %v1546, %v1540
        %v1549 = vmul.f32 %v1546, %v1543
        %v1550 = vadd.f32 %v1533, %v1548
        %v1551 = vadd.f32 %v1534, %v1549
        %1552 = vrot.lane.b32.xlu0 %v738, 78
        %v1553 = vpop.permute.xlu0 %1552
        %1554 = vrot.lane.b32.xlu0 %v739, 78
        %v1555 = vpop.permute.xlu0 %1554
        %vm1556 = vcmask 637952
        %v1557 = vsel %vm1556, %v1553, %v1555
        %v1560 = vsel %vm1556, %v1555, 0.0
        %1561 = vset.pattern.permute.xlu0 47
        %1562 = vperm.xlu0 %1561, %v748
        %v1563 = vpop.permute.xlu0 %1562
        %v1565 = vmul.f32 %v1563, %v1557
        %v1566 = vmul.f32 %v1563, %v1560
        %v1567 = vadd.f32 %v1550, %v1565
        %v1568 = vadd.f32 %v1551, %v1566
        %1569 = vrot.lane.b32.xlu0 %v746, 77
        %v1570 = vpop.permute.xlu0 %1569
        %1571 = vrot.lane.b32.xlu0 %v747, 77
        %v1572 = vpop.permute.xlu0 %1571
        %vm1573 = vcmask 629760
        %v1574 = vsel %vm1573, %v1570, %v1572
        %v1577 = vsel %vm1573, %v1572, 0.0
        %1578 = vset.pattern.permute.xlu0 48
        %1579 = vperm.xlu0 %1578, %v748
        %v1580 = vpop.permute.xlu0 %1579
        %v1582 = vmul.f32 %v1580, %v1574
        %v1583 = vmul.f32 %v1580, %v1577
        %v1584 = vadd.f32 %v1567, %v1582
        %v1585 = vadd.f32 %v1568, %v1583
        %v1588 = vrot.slane %v1584, 1
        %v1589 = vrot.slane %v1585, 1
        %v1592 = vadd.f32 %v1584, %v1588
        %v1593 = vadd.f32 %v1585, %v1589
        %s1594 = sld [smem:[#allocation2]]
        %v1595 = vstv %s1594
        %v1596 = vadd.f32 %v1592, %v1595
        %v1597 = vadd.f32 %v1593, %v1595
        %v1598 = vxor.u32 %v1596, 2147483648
        %v1599 = vxor.u32 %v1597, 2147483648
        %v1600 = vmul.f32 %v1598, 1.442695
        %v1601 = vpow.pop %v1600
        %v1602 = vmul.f32 %v1599, 1.442695
        %v1603 = vpow.pop %v1602
        %v1604 = vadd.f32 %v1601, 1.0
        %v1605 = vadd.f32 %v1603, 1.0
        %v1606 = vrcp.pop %v1604
        %v1607 = vmul.f32 1.0, %v1606
        %v1608 = vrcp.pop %v1605
        %v1609 = vmul.f32 1.0, %v1608
        %v1610 = vld [vmem:[%s297] sm:$0xff]
        %v1611 = vld [vmem:[%s297 + $0x8] sm:$0xff]
        %v1612 = vld [vmem:[%s297 + $0x10] sm:$0xff]
        %v1613 = vld [vmem:[%s297 + $0x18] sm:$0xff]
        %v1614 = vld [vmem:[%s297 + $0x20] sm:$0xff]
        %v1615 = vld [vmem:[%s297 + $0x28] sm:$0xff]
        %v1616 = vld [vmem:[%s297 + $0x30] sm:$0xff]
        %v1617 = vld [vmem:[%s297 + $0x38] sm:$0xff]
        %v1618 = vlaneseq
        %v1619 = vshrl.u32 %v1618, 7
        %v1620 = vsub.s32 0, %v1619
        %v1621 = vrot.slane %v1607, %v1620
        %v1622 = vlaneseq
        %v1623 = vshrl.u32 %v1622, 7
        %v1624 = vsub.s32 0, %v1623
        %v1625 = vrot.slane %v1609, %v1624
        %v1626 = vmul.f32 %v1610, %v1621
        %v1627 = vmul.f32 %v1611, %v1625
        %v1628 = vmul.f32 %v1612, %v1621
        %v1629 = vmul.f32 %v1613, %v1625
        %v1630 = vmul.f32 %v1614, %v1621
        %v1631 = vmul.f32 %v1615, %v1625
        %v1632 = vmul.f32 %v1616, %v1621
        %v1633 = vmul.f32 %v1617, %v1625
        %1634 = vst [vmem:[%s297] sm:$0xff] %v1626
        %1635 = vst [vmem:[%s297 + $0x8] sm:$0xff] %v1627
        %1636 = vst [vmem:[%s297 + $0x10] sm:$0xff] %v1628
        %1637 = vst [vmem:[%s297 + $0x18] sm:$0xff] %v1629
        %1638 = vst [vmem:[%s297 + $0x20] sm:$0xff] %v1630
        %1639 = vst [vmem:[%s297 + $0x28] sm:$0xff] %v1631
        %1640 = vst [vmem:[%s297 + $0x30] sm:$0xff] %v1632
        %1641 = vst [vmem:[%s297 + $0x38] sm:$0xff] %v1633
        %s1642 = sand.u32 %s185, 1
        %s1643 = scalar_lea.sflag [#allocation5], %s1642
        %s1644 = sand.u32 %s185, 1
        %s1645 = smul.addr %s1644, 64
        %s1646 = scalar_lea.vmem [#allocation6], %s1645
        // Predicated region
        $region53: #{tpu_custom_call.1} parent=47 // pred_check
          %p1647 = pneg %p195
        $region54: #{tpu_custom_call.1} parent=47 // pred_check_branch
          %1649 = sbr.rel (%p1647) target = $region56
        $region55: #{tpu_custom_call.1} parent=47 // pred_region
          %s1651 = ssub.s32 1024, 1024
          %1652 = vsyncadd %s1643, %s1651
          %s1653 = smul.addr %s25, 8
          %s1654 = smul.addr %s1653, 128
          %s1655 = scalar_lea.hbm %s7, %s1654
          %s1656 = sshll.u32 %s1646, 4
          %s1657 = int_to_ptr.vmem [resolvable:$true] %s1656
          %1662 = dma.vmem_to_hbm [thread:$0]  %s1657, 1024, %s1655, %s1643, 256, 256, 16
        $region56: #{tpu_custom_call.1} parent=47 // pred_fallthru
          _
      $region48: #{tpu_custom_call.1} parent=5 // pred_fallthru
        _
      %p1663 = scmp.le.s32.totalorder 2, %s20
      // Predicated region
      $region57: #{tpu_custom_call.1} parent=5 // pred_check
        %p1664 = pneg %p1663
      $region58: #{tpu_custom_call.1} parent=5 // pred_check_branch
        %1666 = sbr.rel (%p1664) target = $region60
      $region59: #{tpu_custom_call.1} parent=5 // pred_region
        %s1667 = ssub.s32 %s20, 2
        // Predicated region
        $region61: #{tpu_custom_call.1} parent=59 // pred_check
          %p1668 = pneg %p201
        $region62: #{tpu_custom_call.1} parent=59 // pred_check_branch
          %1670 = sbr.rel (%p1668) target = $region64
        $region63: #{tpu_custom_call.1} parent=59 // pred_region
          %s1671 = sand.u32 %s186, 1
          %s1672 = scalar_lea.sflag [#allocation5], %s1671
          %s1673 = sand.u32 %s186, 1
          %s1674 = smul.addr %s1673, 64
          %s1675 = scalar_lea.vmem [#allocation6], %s1674
          %1676 = dma.done %s1672, 1024
        $region64: #{tpu_custom_call.1} parent=59 // pred_fallthru
          _
      $region60: #{tpu_custom_call.1} parent=5 // pred_fallthru
        _
    $region6: #{tpu_custom_call.1} parent=1 // loop_footer
      %s24 = sadd.s32 1, %s20
    $region7: #{tpu_custom_call.1} parent=1 // loop_footer_branch
      %19 = sbr.rel target = $region3
    $region8: #{tpu_custom_call.1} parent=1 // loop_exit
      _
    %1677 = vsyncpa [#allocation4], 1
    %s1678 = scalar_lea.sflag [#allocation4], 1
    %1679 = vsyncpa %s1678, 1
    %1680 = vsyncpa [#allocation5], 1
    %s1681 = scalar_lea.sflag [#allocation5], 1
    %1682 = vsyncpa %s1681, 1

</llo_original>
